<compile_context>
chip_gen: v7x
topology: tpu7x:2x2x1
jax: 0.10.0
libtpu: 0.0.40
codegen_flags: <defaults>
</compile_context>

<pallas_src>
import jax
import jax.numpy as jnp
from jax import lax
from jax.experimental import pallas as pl
from jax.experimental.pallas import tpu as pltpu


def bow_kernel(text_ref, emb_ref, w_ref, b_ref, out_ref, pooled_ref):
    # text_ref  : SMEM (B, S) int32   -- scalar-prefetched token ids
    # emb_ref   : VMEM (V, D) f32     -- full embedding table, resident across grid
    # w_ref     : VMEM (D, L) f32
    # b_ref     : VMEM (1, L) f32
    # out_ref   : VMEM (TB, L) f32    -- log-probs for this batch tile
    # pooled_ref: VMEM (TB, D) f32    -- max-pooled embeddings scratch
    bi = pl.program_id(0)
    tb, d = pooled_ref.shape
    seq = text_ref.shape[1]          # static
    row_base = bi * tb

    def batch_body(r, carry):
        # Running max over the sequence for batch row `row_base + r`, kept in a
        # (1, D) register accumulator; stored to VMEM once per row.
        def seq_body(s, acc):
            tok = text_ref[row_base + r, s]                 # SMEM scalar read
            row = emb_ref[pl.ds(tok, 1), :]                 # (1, D) gather from resident table
            return jnp.maximum(acc, row)

        acc0 = jnp.full((1, d), -jnp.inf, dtype=jnp.float32)
        acc = lax.fori_loop(0, seq, seq_body, acc0, unroll=True)
        pooled_ref[pl.ds(r, 1), :] = acc
        return carry

    lax.fori_loop(0, tb, batch_body, 0, unroll=True)

    # Batched epilogue: one (TB, D) @ (D, L) matmul + bias + stable log-softmax,
    # one lane-contiguous store of the whole (TB, L) tile.
    logits = jnp.dot(pooled_ref[...], w_ref[...],
                     preferred_element_type=jnp.float32) + b_ref[...]   # (TB, L)
    m = jnp.max(logits, axis=-1, keepdims=True)
    shifted = logits - m
    lse = jnp.log(jnp.sum(jnp.exp(shifted), axis=-1, keepdims=True))
    out_ref[...] = (shifted - lse).astype(out_ref.dtype)


def bow_forward(text, emb_table, w, b):
    """text: (B, S) int32, emb_table: (V, D) f32, w: (D, L) f32, b: (L,) f32
    -> (B, L) f32 log-probs."""
    B, S = text.shape
    V, D = emb_table.shape
    L = w.shape[1]
    b2 = b.reshape(1, L)

    # One grid step per batch tile; at these sizes the whole batch is one tile.
    tb = B if B <= 128 else 128
    assert B % tb == 0, "batch must be divisible by the batch tile"
    grid = (pl.cdiv(B, tb),)

    grid_spec = pltpu.PrefetchScalarGridSpec(
        num_scalar_prefetch=1,      # `text` lands in SMEM, read directly in the kernel
        grid=grid,
        in_specs=[
            # Full embedding table resident in VMEM (constant block index).
            pl.BlockSpec((V, D), lambda bi, text: (0, 0)),
            pl.BlockSpec((D, L), lambda bi, text: (0, 0)),
            pl.BlockSpec((1, L), lambda bi, text: (0, 0)),
        ],
        out_specs=pl.BlockSpec((tb, L), lambda bi, text: (bi, 0)),
        scratch_shapes=[pltpu.VMEM((tb, D), jnp.float32)],
    )

    out = pl.pallas_call(
        bow_kernel,
        out_shape=jax.ShapeDtypeStruct((B, L), jnp.float32),
        grid_spec=grid_spec,
        compiler_params=pltpu.CompilerParams(
            # Batch-tile axis shards across TensorCores on multi-TC parts (v7x);
            # measured no-op on single-TC v5e/v6e.
            dimension_semantics=("parallel",),
            # Explicit, generation-safe budget (table is only ~0.4 MiB, but be
            # explicit so the config is valid on v7x's 64 MiB VMEM as well).
            vmem_limit_bytes=32 * 1024 * 1024,
        ),
    )(text, emb_table, w, b2)
    return out


class BoWClassifierWithEmbeddingPallas:
    """Deterministic synthetic parameters matching the nn.Module __init__ shapes."""

    PADDING_IDX = 3000

    def __init__(self, num_labels, vocab_size, embedding_dim, key):
        k_emb, k_w, k_b = jax.random.split(key, 3)
        # nn.Embedding default init: N(0, 1); padding_idx row zeroed.
        emb = jax.random.normal(k_emb, (vocab_size, embedding_dim), jnp.float32)
        if self.PADDING_IDX < vocab_size:
            emb = emb.at[self.PADDING_IDX].set(0.0)
        # Kept f32 (tiny: 384 KiB) for parity with the f32 nn.Embedding weights.
        self.embedding = emb
        # nn.Linear default init: U(-1/sqrt(in), 1/sqrt(in)) for weight and bias;
        # stored as (in_features, out_features) = (D, L) for the kernel matmul.
        bound = 1.0 / (embedding_dim ** 0.5)
        self.w = jax.random.uniform(k_w, (embedding_dim, num_labels), jnp.float32,
                                    minval=-bound, maxval=bound)
        self.b = jax.random.uniform(k_b, (num_labels,), jnp.float32,
                                    minval=-bound, maxval=bound)
        # TODO(synk): Dropout(0.25) exists in the module but is never applied in forward().

    def __call__(self, text, sequence_lens=None):
        # sequence_lens is ignored, matching the PyTorch forward().
        return bow_forward(text, self.embedding, self.w, self.b)


if __name__ == "__main__":
    key = jax.random.PRNGKey(0)
    k_params, k_text, k_lens = jax.random.split(key, 3)

    num_labels = 4
    vocab_size = 3072          # > padding_idx=3000 so the zeroed row is valid
    embedding_dim = 32
    batch, seq = 8, 16

    model = BoWClassifierWithEmbeddingPallas(num_labels, vocab_size, embedding_dim,
                                             k_params)

    text = jax.random.randint(k_text, (batch, seq), 0, vocab_size, dtype=jnp.int32)
    sequence_lens = jax.random.randint(k_lens, (batch,), 1, seq + 1, dtype=jnp.int32)

    out = model(text, sequence_lens)          # (B, num_labels) log-probs
    out = jax.block_until_ready(out)

    # Pure-JAX reference of the same math (gather -> max over seq -> linear -> log_softmax).
    emb_f32 = jnp.take(model.embedding, text, axis=0)                       # (B, S, D)
    pooled = jnp.max(emb_f32, axis=1)                                       # (B, D)
    ref = jax.nn.log_softmax(pooled @ model.w + model.b, axis=1)

    assert out.shape == (batch, num_labels)
    # log_softmax rows should sum (in prob space) to ~1 and match the reference.
    assert bool(jnp.all(jnp.abs(jnp.sum(jnp.exp(out), axis=1) - 1.0) < 1e-4))
    assert bool(jnp.allclose(out, ref, atol=1e-4, rtol=1e-4))

    print("KERNEL_OK")
</pallas_src>

<mosaic_0001>
module attributes {stable_mosaic.version = 11 : i64} {
  func.func @bow_kernel(%arg0: i32, %arg1: memref<8x16xi32, #tpu.memory_space<smem>>, %arg2: memref<3072x32xf32, #tpu.memory_space<vmem>>, %arg3: memref<32x4xf32, #tpu.memory_space<vmem>>, %arg4: memref<1x4xf32, #tpu.memory_space<vmem>>, %arg5: memref<8x4xf32, #tpu.memory_space<vmem>>, %arg6: memref<8x32xf32, #tpu.memory_space<vmem>>) attributes {dimension_semantics = [#tpu.dimension_semantics<parallel>], iteration_bounds = array<i64: 1>, scalar_prefetch = 1 : i64, scratch_operands = 1 : i64, tpu.core_type = #tpu.core_type<tc>, window_params = [{pipeline_mode = #tpu.pipeline_mode<synchronous>, transform_indices = @transform_0, window_bounds = array<i64: 3072, 32>}, {pipeline_mode = #tpu.pipeline_mode<synchronous>, transform_indices = @transform_1, window_bounds = array<i64: 32, 4>}, {pipeline_mode = #tpu.pipeline_mode<synchronous>, transform_indices = @transform_2, window_bounds = array<i64: 1, 4>}, {transform_indices = @transform_3, window_bounds = array<i64: 8, 4>}]} {
    %c8_i32 = arith.constant 8 : i32
    %0 = arith.muli %arg0, %c8_i32 : i32
    %c0_i32 = arith.constant 0 : i32
    %cst = arith.constant 0xFF800000 : f32
    %1 = vector.broadcast %cst : f32 to vector<1x32xf32>
    %c0_i32_0 = arith.constant 0 : i32
    %2 = arith.addi %0, %c0_i32 : i32
    %3 = arith.index_cast %2 : i32 to index
    %4 = arith.index_cast %c0_i32_0 : i32 to index
    %5 = memref.load %arg1[%3, %4] : memref<8x16xi32, #tpu.memory_space<smem>>
    %6 = arith.index_cast %5 : i32 to index
    %c0 = arith.constant 0 : index
    %7 = vector.load %arg2[%6, %c0] : memref<3072x32xf32, #tpu.memory_space<vmem>>, vector<1x32xf32>
    %8 = arith.maximumf %1, %7 : vector<1x32xf32>
    %c1_i32 = arith.constant 1 : i32
    %9 = arith.addi %0, %c0_i32 : i32
    %10 = arith.index_cast %9 : i32 to index
    %11 = arith.index_cast %c1_i32 : i32 to index
    %12 = memref.load %arg1[%10, %11] : memref<8x16xi32, #tpu.memory_space<smem>>
    %13 = arith.index_cast %12 : i32 to index
    %c0_1 = arith.constant 0 : index
    %14 = vector.load %arg2[%13, %c0_1] : memref<3072x32xf32, #tpu.memory_space<vmem>>, vector<1x32xf32>
    %15 = arith.maximumf %8, %14 : vector<1x32xf32>
    %c2_i32 = arith.constant 2 : i32
    %16 = arith.addi %0, %c0_i32 : i32
    %17 = arith.index_cast %16 : i32 to index
    %18 = arith.index_cast %c2_i32 : i32 to index
    %19 = memref.load %arg1[%17, %18] : memref<8x16xi32, #tpu.memory_space<smem>>
    %20 = arith.index_cast %19 : i32 to index
    %c0_2 = arith.constant 0 : index
    %21 = vector.load %arg2[%20, %c0_2] : memref<3072x32xf32, #tpu.memory_space<vmem>>, vector<1x32xf32>
    %22 = arith.maximumf %15, %21 : vector<1x32xf32>
    %c3_i32 = arith.constant 3 : i32
    %23 = arith.addi %0, %c0_i32 : i32
    %24 = arith.index_cast %23 : i32 to index
    %25 = arith.index_cast %c3_i32 : i32 to index
    %26 = memref.load %arg1[%24, %25] : memref<8x16xi32, #tpu.memory_space<smem>>
    %27 = arith.index_cast %26 : i32 to index
    %c0_3 = arith.constant 0 : index
    %28 = vector.load %arg2[%27, %c0_3] : memref<3072x32xf32, #tpu.memory_space<vmem>>, vector<1x32xf32>
    %29 = arith.maximumf %22, %28 : vector<1x32xf32>
    %c4_i32 = arith.constant 4 : i32
    %30 = arith.addi %0, %c0_i32 : i32
    %31 = arith.index_cast %30 : i32 to index
    %32 = arith.index_cast %c4_i32 : i32 to index
    %33 = memref.load %arg1[%31, %32] : memref<8x16xi32, #tpu.memory_space<smem>>
    %34 = arith.index_cast %33 : i32 to index
    %c0_4 = arith.constant 0 : index
    %35 = vector.load %arg2[%34, %c0_4] : memref<3072x32xf32, #tpu.memory_space<vmem>>, vector<1x32xf32>
    %36 = arith.maximumf %29, %35 : vector<1x32xf32>
    %c5_i32 = arith.constant 5 : i32
    %37 = arith.addi %0, %c0_i32 : i32
    %38 = arith.index_cast %37 : i32 to index
    %39 = arith.index_cast %c5_i32 : i32 to index
    %40 = memref.load %arg1[%38, %39] : memref<8x16xi32, #tpu.memory_space<smem>>
    %41 = arith.index_cast %40 : i32 to index
    %c0_5 = arith.constant 0 : index
    %42 = vector.load %arg2[%41, %c0_5] : memref<3072x32xf32, #tpu.memory_space<vmem>>, vector<1x32xf32>
    %43 = arith.maximumf %36, %42 : vector<1x32xf32>
    %c6_i32 = arith.constant 6 : i32
    %44 = arith.addi %0, %c0_i32 : i32
    %45 = arith.index_cast %44 : i32 to index
    %46 = arith.index_cast %c6_i32 : i32 to index
    %47 = memref.load %arg1[%45, %46] : memref<8x16xi32, #tpu.memory_space<smem>>
    %48 = arith.index_cast %47 : i32 to index
    %c0_6 = arith.constant 0 : index
    %49 = vector.load %arg2[%48, %c0_6] : memref<3072x32xf32, #tpu.memory_space<vmem>>, vector<1x32xf32>
    %50 = arith.maximumf %43, %49 : vector<1x32xf32>
    %c7_i32 = arith.constant 7 : i32
    %51 = arith.addi %0, %c0_i32 : i32
    %52 = arith.index_cast %51 : i32 to index
    %53 = arith.index_cast %c7_i32 : i32 to index
    %54 = memref.load %arg1[%52, %53] : memref<8x16xi32, #tpu.memory_space<smem>>
    %55 = arith.index_cast %54 : i32 to index
    %c0_7 = arith.constant 0 : index
    %56 = vector.load %arg2[%55, %c0_7] : memref<3072x32xf32, #tpu.memory_space<vmem>>, vector<1x32xf32>
    %57 = arith.maximumf %50, %56 : vector<1x32xf32>
    %c8_i32_8 = arith.constant 8 : i32
    %58 = arith.addi %0, %c0_i32 : i32
    %59 = arith.index_cast %58 : i32 to index
    %60 = arith.index_cast %c8_i32_8 : i32 to index
    %61 = memref.load %arg1[%59, %60] : memref<8x16xi32, #tpu.memory_space<smem>>
    %62 = arith.index_cast %61 : i32 to index
    %c0_9 = arith.constant 0 : index
    %63 = vector.load %arg2[%62, %c0_9] : memref<3072x32xf32, #tpu.memory_space<vmem>>, vector<1x32xf32>
    %64 = arith.maximumf %57, %63 : vector<1x32xf32>
    %c9_i32 = arith.constant 9 : i32
    %65 = arith.addi %0, %c0_i32 : i32
    %66 = arith.index_cast %65 : i32 to index
    %67 = arith.index_cast %c9_i32 : i32 to index
    %68 = memref.load %arg1[%66, %67] : memref<8x16xi32, #tpu.memory_space<smem>>
    %69 = arith.index_cast %68 : i32 to index
    %c0_10 = arith.constant 0 : index
    %70 = vector.load %arg2[%69, %c0_10] : memref<3072x32xf32, #tpu.memory_space<vmem>>, vector<1x32xf32>
    %71 = arith.maximumf %64, %70 : vector<1x32xf32>
    %c10_i32 = arith.constant 10 : i32
    %72 = arith.addi %0, %c0_i32 : i32
    %73 = arith.index_cast %72 : i32 to index
    %74 = arith.index_cast %c10_i32 : i32 to index
    %75 = memref.load %arg1[%73, %74] : memref<8x16xi32, #tpu.memory_space<smem>>
    %76 = arith.index_cast %75 : i32 to index
    %c0_11 = arith.constant 0 : index
    %77 = vector.load %arg2[%76, %c0_11] : memref<3072x32xf32, #tpu.memory_space<vmem>>, vector<1x32xf32>
    %78 = arith.maximumf %71, %77 : vector<1x32xf32>
    %c11_i32 = arith.constant 11 : i32
    %79 = arith.addi %0, %c0_i32 : i32
    %80 = arith.index_cast %79 : i32 to index
    %81 = arith.index_cast %c11_i32 : i32 to index
    %82 = memref.load %arg1[%80, %81] : memref<8x16xi32, #tpu.memory_space<smem>>
    %83 = arith.index_cast %82 : i32 to index
    %c0_12 = arith.constant 0 : index
    %84 = vector.load %arg2[%83, %c0_12] : memref<3072x32xf32, #tpu.memory_space<vmem>>, vector<1x32xf32>
    %85 = arith.maximumf %78, %84 : vector<1x32xf32>
    %c12_i32 = arith.constant 12 : i32
    %86 = arith.addi %0, %c0_i32 : i32
    %87 = arith.index_cast %86 : i32 to index
    %88 = arith.index_cast %c12_i32 : i32 to index
    %89 = memref.load %arg1[%87, %88] : memref<8x16xi32, #tpu.memory_space<smem>>
    %90 = arith.index_cast %89 : i32 to index
    %c0_13 = arith.constant 0 : index
    %91 = vector.load %arg2[%90, %c0_13] : memref<3072x32xf32, #tpu.memory_space<vmem>>, vector<1x32xf32>
    %92 = arith.maximumf %85, %91 : vector<1x32xf32>
    %c13_i32 = arith.constant 13 : i32
    %93 = arith.addi %0, %c0_i32 : i32
    %94 = arith.index_cast %93 : i32 to index
    %95 = arith.index_cast %c13_i32 : i32 to index
    %96 = memref.load %arg1[%94, %95] : memref<8x16xi32, #tpu.memory_space<smem>>
    %97 = arith.index_cast %96 : i32 to index
    %c0_14 = arith.constant 0 : index
    %98 = vector.load %arg2[%97, %c0_14] : memref<3072x32xf32, #tpu.memory_space<vmem>>, vector<1x32xf32>
    %99 = arith.maximumf %92, %98 : vector<1x32xf32>
    %c14_i32 = arith.constant 14 : i32
    %100 = arith.addi %0, %c0_i32 : i32
    %101 = arith.index_cast %100 : i32 to index
    %102 = arith.index_cast %c14_i32 : i32 to index
    %103 = memref.load %arg1[%101, %102] : memref<8x16xi32, #tpu.memory_space<smem>>
    %104 = arith.index_cast %103 : i32 to index
    %c0_15 = arith.constant 0 : index
    %105 = vector.load %arg2[%104, %c0_15] : memref<3072x32xf32, #tpu.memory_space<vmem>>, vector<1x32xf32>
    %106 = arith.maximumf %99, %105 : vector<1x32xf32>
    %c15_i32 = arith.constant 15 : i32
    %107 = arith.addi %0, %c0_i32 : i32
    %108 = arith.index_cast %107 : i32 to index
    %109 = arith.index_cast %c15_i32 : i32 to index
    %110 = memref.load %arg1[%108, %109] : memref<8x16xi32, #tpu.memory_space<smem>>
    %111 = arith.index_cast %110 : i32 to index
    %c0_16 = arith.constant 0 : index
    %112 = vector.load %arg2[%111, %c0_16] : memref<3072x32xf32, #tpu.memory_space<vmem>>, vector<1x32xf32>
    %113 = arith.maximumf %106, %112 : vector<1x32xf32>
    %c16_i32 = arith.constant 16 : i32
    %114 = arith.index_cast %c0_i32 : i32 to index
    %c0_17 = arith.constant 0 : index
    %115 = vector.load %arg6[%114, %c0_17] : memref<8x32xf32, #tpu.memory_space<vmem>>, vector<1x32xf32>
    tpu.vector_store %arg6[%114, %c0_17], %113 {strides = array<i32>} : memref<8x32xf32, #tpu.memory_space<vmem>>, vector<1x32xf32>,
    %c1_i32_18 = arith.constant 1 : i32
    %cst_19 = arith.constant 0xFF800000 : f32
    %116 = vector.broadcast %cst_19 : f32 to vector<1x32xf32>
    %c0_i32_20 = arith.constant 0 : i32
    %117 = arith.addi %0, %c1_i32_18 : i32
    %118 = arith.index_cast %117 : i32 to index
    %119 = arith.index_cast %c0_i32_20 : i32 to index
    %120 = memref.load %arg1[%118, %119] : memref<8x16xi32, #tpu.memory_space<smem>>
    %121 = arith.index_cast %120 : i32 to index
    %c0_21 = arith.constant 0 : index
    %122 = vector.load %arg2[%121, %c0_21] : memref<3072x32xf32, #tpu.memory_space<vmem>>, vector<1x32xf32>
    %123 = arith.maximumf %116, %122 : vector<1x32xf32>
    %c1_i32_22 = arith.constant 1 : i32
    %124 = arith.addi %0, %c1_i32_18 : i32
    %125 = arith.index_cast %124 : i32 to index
    %126 = arith.index_cast %c1_i32_22 : i32 to index
    %127 = memref.load %arg1[%125, %126] : memref<8x16xi32, #tpu.memory_space<smem>>
    %128 = arith.index_cast %127 : i32 to index
    %c0_23 = arith.constant 0 : index
    %129 = vector.load %arg2[%128, %c0_23] : memref<3072x32xf32, #tpu.memory_space<vmem>>, vector<1x32xf32>
    %130 = arith.maximumf %123, %129 : vector<1x32xf32>
    %c2_i32_24 = arith.constant 2 : i32
    %131 = arith.addi %0, %c1_i32_18 : i32
    %132 = arith.index_cast %131 : i32 to index
    %133 = arith.index_cast %c2_i32_24 : i32 to index
    %134 = memref.load %arg1[%132, %133] : memref<8x16xi32, #tpu.memory_space<smem>>
    %135 = arith.index_cast %134 : i32 to index
    %c0_25 = arith.constant 0 : index
    %136 = vector.load %arg2[%135, %c0_25] : memref<3072x32xf32, #tpu.memory_space<vmem>>, vector<1x32xf32>
    %137 = arith.maximumf %130, %136 : vector<1x32xf32>
    %c3_i32_26 = arith.constant 3 : i32
    %138 = arith.addi %0, %c1_i32_18 : i32
    %139 = arith.index_cast %138 : i32 to index
    %140 = arith.index_cast %c3_i32_26 : i32 to index
    %141 = memref.load %arg1[%139, %140] : memref<8x16xi32, #tpu.memory_space<smem>>
    %142 = arith.index_cast %141 : i32 to index
    %c0_27 = arith.constant 0 : index
    %143 = vector.load %arg2[%142, %c0_27] : memref<3072x32xf32, #tpu.memory_space<vmem>>, vector<1x32xf32>
    %144 = arith.maximumf %137, %143 : vector<1x32xf32>
    %c4_i32_28 = arith.constant 4 : i32
    %145 = arith.addi %0, %c1_i32_18 : i32
    %146 = arith.index_cast %145 : i32 to index
    %147 = arith.index_cast %c4_i32_28 : i32 to index
    %148 = memref.load %arg1[%146, %147] : memref<8x16xi32, #tpu.memory_space<smem>>
    %149 = arith.index_cast %148 : i32 to index
    %c0_29 = arith.constant 0 : index
    %150 = vector.load %arg2[%149, %c0_29] : memref<3072x32xf32, #tpu.memory_space<vmem>>, vector<1x32xf32>
    %151 = arith.maximumf %144, %150 : vector<1x32xf32>
    %c5_i32_30 = arith.constant 5 : i32
    %152 = arith.addi %0, %c1_i32_18 : i32
    %153 = arith.index_cast %152 : i32 to index
    %154 = arith.index_cast %c5_i32_30 : i32 to index
    %155 = memref.load %arg1[%153, %154] : memref<8x16xi32, #tpu.memory_space<smem>>
    %156 = arith.index_cast %155 : i32 to index
    %c0_31 = arith.constant 0 : index
    %157 = vector.load %arg2[%156, %c0_31] : memref<3072x32xf32, #tpu.memory_space<vmem>>, vector<1x32xf32>
    %158 = arith.maximumf %151, %157 : vector<1x32xf32>
    %c6_i32_32 = arith.constant 6 : i32
    %159 = arith.addi %0, %c1_i32_18 : i32
    %160 = arith.index_cast %159 : i32 to index
    %161 = arith.index_cast %c6_i32_32 : i32 to index
    %162 = memref.load %arg1[%160, %161] : memref<8x16xi32, #tpu.memory_space<smem>>
    %163 = arith.index_cast %162 : i32 to index
    %c0_33 = arith.constant 0 : index
    %164 = vector.load %arg2[%163, %c0_33] : memref<3072x32xf32, #tpu.memory_space<vmem>>, vector<1x32xf32>
    %165 = arith.maximumf %158, %164 : vector<1x32xf32>
    %c7_i32_34 = arith.constant 7 : i32
    %166 = arith.addi %0, %c1_i32_18 : i32
    %167 = arith.index_cast %166 : i32 to index
    %168 = arith.index_cast %c7_i32_34 : i32 to index
    %169 = memref.load %arg1[%167, %168] : memref<8x16xi32, #tpu.memory_space<smem>>
    %170 = arith.index_cast %169 : i32 to index
    %c0_35 = arith.constant 0 : index
    %171 = vector.load %arg2[%170, %c0_35] : memref<3072x32xf32, #tpu.memory_space<vmem>>, vector<1x32xf32>
    %172 = arith.maximumf %165, %171 : vector<1x32xf32>
    %c8_i32_36 = arith.constant 8 : i32
    %173 = arith.addi %0, %c1_i32_18 : i32
    %174 = arith.index_cast %173 : i32 to index
    %175 = arith.index_cast %c8_i32_36 : i32 to index
    %176 = memref.load %arg1[%174, %175] : memref<8x16xi32, #tpu.memory_space<smem>>
    %177 = arith.index_cast %176 : i32 to index
    %c0_37 = arith.constant 0 : index
    %178 = vector.load %arg2[%177, %c0_37] : memref<3072x32xf32, #tpu.memory_space<vmem>>, vector<1x32xf32>
    %179 = arith.maximumf %172, %178 : vector<1x32xf32>
    %c9_i32_38 = arith.constant 9 : i32
    %180 = arith.addi %0, %c1_i32_18 : i32
    %181 = arith.index_cast %180 : i32 to index
    %182 = arith.index_cast %c9_i32_38 : i32 to index
    %183 = memref.load %arg1[%181, %182] : memref<8x16xi32, #tpu.memory_space<smem>>
    %184 = arith.index_cast %183 : i32 to index
    %c0_39 = arith.constant 0 : index
    %185 = vector.load %arg2[%184, %c0_39] : memref<3072x32xf32, #tpu.memory_space<vmem>>, vector<1x32xf32>
    %186 = arith.maximumf %179, %185 : vector<1x32xf32>
    %c10_i32_40 = arith.constant 10 : i32
    %187 = arith.addi %0, %c1_i32_18 : i32
    %188 = arith.index_cast %187 : i32 to index
    %189 = arith.index_cast %c10_i32_40 : i32 to index
    %190 = memref.load %arg1[%188, %189] : memref<8x16xi32, #tpu.memory_space<smem>>
    %191 = arith.index_cast %190 : i32 to index
    %c0_41 = arith.constant 0 : index
    %192 = vector.load %arg2[%191, %c0_41] : memref<3072x32xf32, #tpu.memory_space<vmem>>, vector<1x32xf32>
    %193 = arith.maximumf %186, %192 : vector<1x32xf32>
    %c11_i32_42 = arith.constant 11 : i32
    %194 = arith.addi %0, %c1_i32_18 : i32
    %195 = arith.index_cast %194 : i32 to index
    %196 = arith.index_cast %c11_i32_42 : i32 to index
    %197 = memref.load %arg1[%195, %196] : memref<8x16xi32, #tpu.memory_space<smem>>
    %198 = arith.index_cast %197 : i32 to index
    %c0_43 = arith.constant 0 : index
    %199 = vector.load %arg2[%198, %c0_43] : memref<3072x32xf32, #tpu.memory_space<vmem>>, vector<1x32xf32>
    %200 = arith.maximumf %193, %199 : vector<1x32xf32>
    %c12_i32_44 = arith.constant 12 : i32
    %201 = arith.addi %0, %c1_i32_18 : i32
    %202 = arith.index_cast %201 : i32 to index
    %203 = arith.index_cast %c12_i32_44 : i32 to index
    %204 = memref.load %arg1[%202, %203] : memref<8x16xi32, #tpu.memory_space<smem>>
    %205 = arith.index_cast %204 : i32 to index
    %c0_45 = arith.constant 0 : index
    %206 = vector.load %arg2[%205, %c0_45] : memref<3072x32xf32, #tpu.memory_space<vmem>>, vector<1x32xf32>
    %207 = arith.maximumf %200, %206 : vector<1x32xf32>
    %c13_i32_46 = arith.constant 13 : i32
    %208 = arith.addi %0, %c1_i32_18 : i32
    %209 = arith.index_cast %208 : i32 to index
    %210 = arith.index_cast %c13_i32_46 : i32 to index
    %211 = memref.load %arg1[%209, %210] : memref<8x16xi32, #tpu.memory_space<smem>>
    %212 = arith.index_cast %211 : i32 to index
    %c0_47 = arith.constant 0 : index
    %213 = vector.load %arg2[%212, %c0_47] : memref<3072x32xf32, #tpu.memory_space<vmem>>, vector<1x32xf32>
    %214 = arith.maximumf %207, %213 : vector<1x32xf32>
    %c14_i32_48 = arith.constant 14 : i32
    %215 = arith.addi %0, %c1_i32_18 : i32
    %216 = arith.index_cast %215 : i32 to index
    %217 = arith.index_cast %c14_i32_48 : i32 to index
    %218 = memref.load %arg1[%216, %217] : memref<8x16xi32, #tpu.memory_space<smem>>
    %219 = arith.index_cast %218 : i32 to index
    %c0_49 = arith.constant 0 : index
    %220 = vector.load %arg2[%219, %c0_49] : memref<3072x32xf32, #tpu.memory_space<vmem>>, vector<1x32xf32>
    %221 = arith.maximumf %214, %220 : vector<1x32xf32>
    %c15_i32_50 = arith.constant 15 : i32
    %222 = arith.addi %0, %c1_i32_18 : i32
    %223 = arith.index_cast %222 : i32 to index
    %224 = arith.index_cast %c15_i32_50 : i32 to index
    %225 = memref.load %arg1[%223, %224] : memref<8x16xi32, #tpu.memory_space<smem>>
    %226 = arith.index_cast %225 : i32 to index
    %c0_51 = arith.constant 0 : index
    %227 = vector.load %arg2[%226, %c0_51] : memref<3072x32xf32, #tpu.memory_space<vmem>>, vector<1x32xf32>
    %228 = arith.maximumf %221, %227 : vector<1x32xf32>
    %c16_i32_52 = arith.constant 16 : i32
    %229 = arith.index_cast %c1_i32_18 : i32 to index
    %c0_53 = arith.constant 0 : index
    %230 = vector.load %arg6[%229, %c0_53] : memref<8x32xf32, #tpu.memory_space<vmem>>, vector<1x32xf32>
    tpu.vector_store %arg6[%229, %c0_53], %228 {strides = array<i32>} : memref<8x32xf32, #tpu.memory_space<vmem>>, vector<1x32xf32>,
    %c2_i32_54 = arith.constant 2 : i32
    %cst_55 = arith.constant 0xFF800000 : f32
    %231 = vector.broadcast %cst_55 : f32 to vector<1x32xf32>
    %c0_i32_56 = arith.constant 0 : i32
    %232 = arith.addi %0, %c2_i32_54 : i32
    %233 = arith.index_cast %232 : i32 to index
    %234 = arith.index_cast %c0_i32_56 : i32 to index
    %235 = memref.load %arg1[%233, %234] : memref<8x16xi32, #tpu.memory_space<smem>>
    %236 = arith.index_cast %235 : i32 to index
    %c0_57 = arith.constant 0 : index
    %237 = vector.load %arg2[%236, %c0_57] : memref<3072x32xf32, #tpu.memory_space<vmem>>, vector<1x32xf32>
    %238 = arith.maximumf %231, %237 : vector<1x32xf32>
    %c1_i32_58 = arith.constant 1 : i32
    %239 = arith.addi %0, %c2_i32_54 : i32
    %240 = arith.index_cast %239 : i32 to index
    %241 = arith.index_cast %c1_i32_58 : i32 to index
    %242 = memref.load %arg1[%240, %241] : memref<8x16xi32, #tpu.memory_space<smem>>
    %243 = arith.index_cast %242 : i32 to index
    %c0_59 = arith.constant 0 : index
    %244 = vector.load %arg2[%243, %c0_59] : memref<3072x32xf32, #tpu.memory_space<vmem>>, vector<1x32xf32>
    %245 = arith.maximumf %238, %244 : vector<1x32xf32>
    %c2_i32_60 = arith.constant 2 : i32
    %246 = arith.addi %0, %c2_i32_54 : i32
    %247 = arith.index_cast %246 : i32 to index
    %248 = arith.index_cast %c2_i32_60 : i32 to index
    %249 = memref.load %arg1[%247, %248] : memref<8x16xi32, #tpu.memory_space<smem>>
    %250 = arith.index_cast %249 : i32 to index
    %c0_61 = arith.constant 0 : index
    %251 = vector.load %arg2[%250, %c0_61] : memref<3072x32xf32, #tpu.memory_space<vmem>>, vector<1x32xf32>
    %252 = arith.maximumf %245, %251 : vector<1x32xf32>
    %c3_i32_62 = arith.constant 3 : i32
    %253 = arith.addi %0, %c2_i32_54 : i32
    %254 = arith.index_cast %253 : i32 to index
    %255 = arith.index_cast %c3_i32_62 : i32 to index
    %256 = memref.load %arg1[%254, %255] : memref<8x16xi32, #tpu.memory_space<smem>>
    %257 = arith.index_cast %256 : i32 to index
    %c0_63 = arith.constant 0 : index
    %258 = vector.load %arg2[%257, %c0_63] : memref<3072x32xf32, #tpu.memory_space<vmem>>, vector<1x32xf32>
    %259 = arith.maximumf %252, %258 : vector<1x32xf32>
    %c4_i32_64 = arith.constant 4 : i32
    %260 = arith.addi %0, %c2_i32_54 : i32
    %261 = arith.index_cast %260 : i32 to index
    %262 = arith.index_cast %c4_i32_64 : i32 to index
    %263 = memref.load %arg1[%261, %262] : memref<8x16xi32, #tpu.memory_space<smem>>
    %264 = arith.index_cast %263 : i32 to index
    %c0_65 = arith.constant 0 : index
    %265 = vector.load %arg2[%264, %c0_65] : memref<3072x32xf32, #tpu.memory_space<vmem>>, vector<1x32xf32>
    %266 = arith.maximumf %259, %265 : vector<1x32xf32>
    %c5_i32_66 = arith.constant 5 : i32
    %267 = arith.addi %0, %c2_i32_54 : i32
    %268 = arith.index_cast %267 : i32 to index
    %269 = arith.index_cast %c5_i32_66 : i32 to index
    %270 = memref.load %arg1[%268, %269] : memref<8x16xi32, #tpu.memory_space<smem>>
    %271 = arith.index_cast %270 : i32 to index
    %c0_67 = arith.constant 0 : index
    %272 = vector.load %arg2[%271, %c0_67] : memref<3072x32xf32, #tpu.memory_space<vmem>>, vector<1x32xf32>
    %273 = arith.maximumf %266, %272 : vector<1x32xf32>
    %c6_i32_68 = arith.constant 6 : i32
    %274 = arith.addi %0, %c2_i32_54 : i32
    %275 = arith.index_cast %274 : i32 to index
    %276 = arith.index_cast %c6_i32_68 : i32 to index
    %277 = memref.load %arg1[%275, %276] : memref<8x16xi32, #tpu.memory_space<smem>>
    %278 = arith.index_cast %277 : i32 to index
    %c0_69 = arith.constant 0 : index
    %279 = vector.load %arg2[%278, %c0_69] : memref<3072x32xf32, #tpu.memory_space<vmem>>, vector<1x32xf32>
    %280 = arith.maximumf %273, %279 : vector<1x32xf32>
    %c7_i32_70 = arith.constant 7 : i32
    %281 = arith.addi %0, %c2_i32_54 : i32
    %282 = arith.index_cast %281 : i32 to index
    %283 = arith.index_cast %c7_i32_70 : i32 to index
    %284 = memref.load %arg1[%282, %283] : memref<8x16xi32, #tpu.memory_space<smem>>
    %285 = arith.index_cast %284 : i32 to index
    %c0_71 = arith.constant 0 : index
    %286 = vector.load %arg2[%285, %c0_71] : memref<3072x32xf32, #tpu.memory_space<vmem>>, vector<1x32xf32>
    %287 = arith.maximumf %280, %286 : vector<1x32xf32>
    %c8_i32_72 = arith.constant 8 : i32
    %288 = arith.addi %0, %c2_i32_54 : i32
    %289 = arith.index_cast %288 : i32 to index
    %290 = arith.index_cast %c8_i32_72 : i32 to index
    %291 = memref.load %arg1[%289, %290] : memref<8x16xi32, #tpu.memory_space<smem>>
    %292 = arith.index_cast %291 : i32 to index
    %c0_73 = arith.constant 0 : index
    %293 = vector.load %arg2[%292, %c0_73] : memref<3072x32xf32, #tpu.memory_space<vmem>>, vector<1x32xf32>
    %294 = arith.maximumf %287, %293 : vector<1x32xf32>
    %c9_i32_74 = arith.constant 9 : i32
    %295 = arith.addi %0, %c2_i32_54 : i32
    %296 = arith.index_cast %295 : i32 to index
    %297 = arith.index_cast %c9_i32_74 : i32 to index
    %298 = memref.load %arg1[%296, %297] : memref<8x16xi32, #tpu.memory_space<smem>>
    %299 = arith.index_cast %298 : i32 to index
    %c0_75 = arith.constant 0 : index
    %300 = vector.load %arg2[%299, %c0_75] : memref<3072x32xf32, #tpu.memory_space<vmem>>, vector<1x32xf32>
    %301 = arith.maximumf %294, %300 : vector<1x32xf32>
    %c10_i32_76 = arith.constant 10 : i32
    %302 = arith.addi %0, %c2_i32_54 : i32
    %303 = arith.index_cast %302 : i32 to index
    %304 = arith.index_cast %c10_i32_76 : i32 to index
    %305 = memref.load %arg1[%303, %304] : memref<8x16xi32, #tpu.memory_space<smem>>
    %306 = arith.index_cast %305 : i32 to index
    %c0_77 = arith.constant 0 : index
    %307 = vector.load %arg2[%306, %c0_77] : memref<3072x32xf32, #tpu.memory_space<vmem>>, vector<1x32xf32>
    %308 = arith.maximumf %301, %307 : vector<1x32xf32>
    %c11_i32_78 = arith.constant 11 : i32
    %309 = arith.addi %0, %c2_i32_54 : i32
    %310 = arith.index_cast %309 : i32 to index
    %311 = arith.index_cast %c11_i32_78 : i32 to index
    %312 = memref.load %arg1[%310, %311] : memref<8x16xi32, #tpu.memory_space<smem>>
    %313 = arith.index_cast %312 : i32 to index
    %c0_79 = arith.constant 0 : index
    %314 = vector.load %arg2[%313, %c0_79] : memref<3072x32xf32, #tpu.memory_space<vmem>>, vector<1x32xf32>
    %315 = arith.maximumf %308, %314 : vector<1x32xf32>
    %c12_i32_80 = arith.constant 12 : i32
    %316 = arith.addi %0, %c2_i32_54 : i32
    %317 = arith.index_cast %316 : i32 to index
    %318 = arith.index_cast %c12_i32_80 : i32 to index
    %319 = memref.load %arg1[%317, %318] : memref<8x16xi32, #tpu.memory_space<smem>>
    %320 = arith.index_cast %319 : i32 to index
    %c0_81 = arith.constant 0 : index
    %321 = vector.load %arg2[%320, %c0_81] : memref<3072x32xf32, #tpu.memory_space<vmem>>, vector<1x32xf32>
    %322 = arith.maximumf %315, %321 : vector<1x32xf32>
    %c13_i32_82 = arith.constant 13 : i32
    %323 = arith.addi %0, %c2_i32_54 : i32
    %324 = arith.index_cast %323 : i32 to index
    %325 = arith.index_cast %c13_i32_82 : i32 to index
    %326 = memref.load %arg1[%324, %325] : memref<8x16xi32, #tpu.memory_space<smem>>
    %327 = arith.index_cast %326 : i32 to index
    %c0_83 = arith.constant 0 : index
    %328 = vector.load %arg2[%327, %c0_83] : memref<3072x32xf32, #tpu.memory_space<vmem>>, vector<1x32xf32>
    %329 = arith.maximumf %322, %328 : vector<1x32xf32>
    %c14_i32_84 = arith.constant 14 : i32
    %330 = arith.addi %0, %c2_i32_54 : i32
    %331 = arith.index_cast %330 : i32 to index
    %332 = arith.index_cast %c14_i32_84 : i32 to index
    %333 = memref.load %arg1[%331, %332] : memref<8x16xi32, #tpu.memory_space<smem>>
    %334 = arith.index_cast %333 : i32 to index
    %c0_85 = arith.constant 0 : index
    %335 = vector.load %arg2[%334, %c0_85] : memref<3072x32xf32, #tpu.memory_space<vmem>>, vector<1x32xf32>
    %336 = arith.maximumf %329, %335 : vector<1x32xf32>
    %c15_i32_86 = arith.constant 15 : i32
    %337 = arith.addi %0, %c2_i32_54 : i32
    %338 = arith.index_cast %337 : i32 to index
    %339 = arith.index_cast %c15_i32_86 : i32 to index
    %340 = memref.load %arg1[%338, %339] : memref<8x16xi32, #tpu.memory_space<smem>>
    %341 = arith.index_cast %340 : i32 to index
    %c0_87 = arith.constant 0 : index
    %342 = vector.load %arg2[%341, %c0_87] : memref<3072x32xf32, #tpu.memory_space<vmem>>, vector<1x32xf32>
    %343 = arith.maximumf %336, %342 : vector<1x32xf32>
    %c16_i32_88 = arith.constant 16 : i32
    %344 = arith.index_cast %c2_i32_54 : i32 to index
    %c0_89 = arith.constant 0 : index
    %345 = vector.load %arg6[%344, %c0_89] : memref<8x32xf32, #tpu.memory_space<vmem>>, vector<1x32xf32>
    tpu.vector_store %arg6[%344, %c0_89], %343 {strides = array<i32>} : memref<8x32xf32, #tpu.memory_space<vmem>>, vector<1x32xf32>,
    %c3_i32_90 = arith.constant 3 : i32
    %cst_91 = arith.constant 0xFF800000 : f32
    %346 = vector.broadcast %cst_91 : f32 to vector<1x32xf32>
    %c0_i32_92 = arith.constant 0 : i32
    %347 = arith.addi %0, %c3_i32_90 : i32
    %348 = arith.index_cast %347 : i32 to index
    %349 = arith.index_cast %c0_i32_92 : i32 to index
    %350 = memref.load %arg1[%348, %349] : memref<8x16xi32, #tpu.memory_space<smem>>
    %351 = arith.index_cast %350 : i32 to index
    %c0_93 = arith.constant 0 : index
    %352 = vector.load %arg2[%351, %c0_93] : memref<3072x32xf32, #tpu.memory_space<vmem>>, vector<1x32xf32>
    %353 = arith.maximumf %346, %352 : vector<1x32xf32>
    %c1_i32_94 = arith.constant 1 : i32
    %354 = arith.addi %0, %c3_i32_90 : i32
    %355 = arith.index_cast %354 : i32 to index
    %356 = arith.index_cast %c1_i32_94 : i32 to index
    %357 = memref.load %arg1[%355, %356] : memref<8x16xi32, #tpu.memory_space<smem>>
    %358 = arith.index_cast %357 : i32 to index
    %c0_95 = arith.constant 0 : index
    %359 = vector.load %arg2[%358, %c0_95] : memref<3072x32xf32, #tpu.memory_space<vmem>>, vector<1x32xf32>
    %360 = arith.maximumf %353, %359 : vector<1x32xf32>
    %c2_i32_96 = arith.constant 2 : i32
    %361 = arith.addi %0, %c3_i32_90 : i32
    %362 = arith.index_cast %361 : i32 to index
    %363 = arith.index_cast %c2_i32_96 : i32 to index
    %364 = memref.load %arg1[%362, %363] : memref<8x16xi32, #tpu.memory_space<smem>>
    %365 = arith.index_cast %364 : i32 to index
    %c0_97 = arith.constant 0 : index
    %366 = vector.load %arg2[%365, %c0_97] : memref<3072x32xf32, #tpu.memory_space<vmem>>, vector<1x32xf32>
    %367 = arith.maximumf %360, %366 : vector<1x32xf32>
    %c3_i32_98 = arith.constant 3 : i32
    %368 = arith.addi %0, %c3_i32_90 : i32
    %369 = arith.index_cast %368 : i32 to index
    %370 = arith.index_cast %c3_i32_98 : i32 to index
    %371 = memref.load %arg1[%369, %370] : memref<8x16xi32, #tpu.memory_space<smem>>
    %372 = arith.index_cast %371 : i32 to index
    %c0_99 = arith.constant 0 : index
    %373 = vector.load %arg2[%372, %c0_99] : memref<3072x32xf32, #tpu.memory_space<vmem>>, vector<1x32xf32>
    %374 = arith.maximumf %367, %373 : vector<1x32xf32>
    %c4_i32_100 = arith.constant 4 : i32
    %375 = arith.addi %0, %c3_i32_90 : i32
    %376 = arith.index_cast %375 : i32 to index
    %377 = arith.index_cast %c4_i32_100 : i32 to index
    %378 = memref.load %arg1[%376, %377] : memref<8x16xi32, #tpu.memory_space<smem>>
    %379 = arith.index_cast %378 : i32 to index
    %c0_101 = arith.constant 0 : index
    %380 = vector.load %arg2[%379, %c0_101] : memref<3072x32xf32, #tpu.memory_space<vmem>>, vector<1x32xf32>
    %381 = arith.maximumf %374, %380 : vector<1x32xf32>
    %c5_i32_102 = arith.constant 5 : i32
    %382 = arith.addi %0, %c3_i32_90 : i32
    %383 = arith.index_cast %382 : i32 to index
    %384 = arith.index_cast %c5_i32_102 : i32 to index
    %385 = memref.load %arg1[%383, %384] : memref<8x16xi32, #tpu.memory_space<smem>>
    %386 = arith.index_cast %385 : i32 to index
    %c0_103 = arith.constant 0 : index
    %387 = vector.load %arg2[%386, %c0_103] : memref<3072x32xf32, #tpu.memory_space<vmem>>, vector<1x32xf32>
    %388 = arith.maximumf %381, %387 : vector<1x32xf32>
    %c6_i32_104 = arith.constant 6 : i32
    %389 = arith.addi %0, %c3_i32_90 : i32
    %390 = arith.index_cast %389 : i32 to index
    %391 = arith.index_cast %c6_i32_104 : i32 to index
    %392 = memref.load %arg1[%390, %391] : memref<8x16xi32, #tpu.memory_space<smem>>
    %393 = arith.index_cast %392 : i32 to index
    %c0_105 = arith.constant 0 : index
    %394 = vector.load %arg2[%393, %c0_105] : memref<3072x32xf32, #tpu.memory_space<vmem>>, vector<1x32xf32>
    %395 = arith.maximumf %388, %394 : vector<1x32xf32>
    %c7_i32_106 = arith.constant 7 : i32
    %396 = arith.addi %0, %c3_i32_90 : i32
    %397 = arith.index_cast %396 : i32 to index
    %398 = arith.index_cast %c7_i32_106 : i32 to index
    %399 = memref.load %arg1[%397, %398] : memref<8x16xi32, #tpu.memory_space<smem>>
    %400 = arith.index_cast %399 : i32 to index
    %c0_107 = arith.constant 0 : index
    %401 = vector.load %arg2[%400, %c0_107] : memref<3072x32xf32, #tpu.memory_space<vmem>>, vector<1x32xf32>
    %402 = arith.maximumf %395, %401 : vector<1x32xf32>
    %c8_i32_108 = arith.constant 8 : i32
    %403 = arith.addi %0, %c3_i32_90 : i32
    %404 = arith.index_cast %403 : i32 to index
    %405 = arith.index_cast %c8_i32_108 : i32 to index
    %406 = memref.load %arg1[%404, %405] : memref<8x16xi32, #tpu.memory_space<smem>>
    %407 = arith.index_cast %406 : i32 to index
    %c0_109 = arith.constant 0 : index
    %408 = vector.load %arg2[%407, %c0_109] : memref<3072x32xf32, #tpu.memory_space<vmem>>, vector<1x32xf32>
    %409 = arith.maximumf %402, %408 : vector<1x32xf32>
    %c9_i32_110 = arith.constant 9 : i32
    %410 = arith.addi %0, %c3_i32_90 : i32
    %411 = arith.index_cast %410 : i32 to index
    %412 = arith.index_cast %c9_i32_110 : i32 to index
    %413 = memref.load %arg1[%411, %412] : memref<8x16xi32, #tpu.memory_space<smem>>
    %414 = arith.index_cast %413 : i32 to index
    %c0_111 = arith.constant 0 : index
    %415 = vector.load %arg2[%414, %c0_111] : memref<3072x32xf32, #tpu.memory_space<vmem>>, vector<1x32xf32>
    %416 = arith.maximumf %409, %415 : vector<1x32xf32>
    %c10_i32_112 = arith.constant 10 : i32
    %417 = arith.addi %0, %c3_i32_90 : i32
    %418 = arith.index_cast %417 : i32 to index
    %419 = arith.index_cast %c10_i32_112 : i32 to index
    %420 = memref.load %arg1[%418, %419] : memref<8x16xi32, #tpu.memory_space<smem>>
    %421 = arith.index_cast %420 : i32 to index
    %c0_113 = arith.constant 0 : index
    %422 = vector.load %arg2[%421, %c0_113] : memref<3072x32xf32, #tpu.memory_space<vmem>>, vector<1x32xf32>
    %423 = arith.maximumf %416, %422 : vector<1x32xf32>
    %c11_i32_114 = arith.constant 11 : i32
    %424 = arith.addi %0, %c3_i32_90 : i32
    %425 = arith.index_cast %424 : i32 to index
    %426 = arith.index_cast %c11_i32_114 : i32 to index
    %427 = memref.load %arg1[%425, %426] : memref<8x16xi32, #tpu.memory_space<smem>>
    %428 = arith.index_cast %427 : i32 to index
    %c0_115 = arith.constant 0 : index
    %429 = vector.load %arg2[%428, %c0_115] : memref<3072x32xf32, #tpu.memory_space<vmem>>, vector<1x32xf32>
    %430 = arith.maximumf %423, %429 : vector<1x32xf32>
    %c12_i32_116 = arith.constant 12 : i32
    %431 = arith.addi %0, %c3_i32_90 : i32
    %432 = arith.index_cast %431 : i32 to index
    %433 = arith.index_cast %c12_i32_116 : i32 to index
    %434 = memref.load %arg1[%432, %433] : memref<8x16xi32, #tpu.memory_space<smem>>
    %435 = arith.index_cast %434 : i32 to index
    %c0_117 = arith.constant 0 : index
    %436 = vector.load %arg2[%435, %c0_117] : memref<3072x32xf32, #tpu.memory_space<vmem>>, vector<1x32xf32>
    %437 = arith.maximumf %430, %436 : vector<1x32xf32>
    %c13_i32_118 = arith.constant 13 : i32
    %438 = arith.addi %0, %c3_i32_90 : i32
    %439 = arith.index_cast %438 : i32 to index
    %440 = arith.index_cast %c13_i32_118 : i32 to index
    %441 = memref.load %arg1[%439, %440] : memref<8x16xi32, #tpu.memory_space<smem>>
    %442 = arith.index_cast %441 : i32 to index
    %c0_119 = arith.constant 0 : index
    %443 = vector.load %arg2[%442, %c0_119] : memref<3072x32xf32, #tpu.memory_space<vmem>>, vector<1x32xf32>
    %444 = arith.maximumf %437, %443 : vector<1x32xf32>
    %c14_i32_120 = arith.constant 14 : i32
    %445 = arith.addi %0, %c3_i32_90 : i32
    %446 = arith.index_cast %445 : i32 to index
    %447 = arith.index_cast %c14_i32_120 : i32 to index
    %448 = memref.load %arg1[%446, %447] : memref<8x16xi32, #tpu.memory_space<smem>>
    %449 = arith.index_cast %448 : i32 to index
    %c0_121 = arith.constant 0 : index
    %450 = vector.load %arg2[%449, %c0_121] : memref<3072x32xf32, #tpu.memory_space<vmem>>, vector<1x32xf32>
    %451 = arith.maximumf %444, %450 : vector<1x32xf32>
    %c15_i32_122 = arith.constant 15 : i32
    %452 = arith.addi %0, %c3_i32_90 : i32
    %453 = arith.index_cast %452 : i32 to index
    %454 = arith.index_cast %c15_i32_122 : i32 to index
    %455 = memref.load %arg1[%453, %454] : memref<8x16xi32, #tpu.memory_space<smem>>
    %456 = arith.index_cast %455 : i32 to index
    %c0_123 = arith.constant 0 : index
    %457 = vector.load %arg2[%456, %c0_123] : memref<3072x32xf32, #tpu.memory_space<vmem>>, vector<1x32xf32>
    %458 = arith.maximumf %451, %457 : vector<1x32xf32>
    %c16_i32_124 = arith.constant 16 : i32
    %459 = arith.index_cast %c3_i32_90 : i32 to index
    %c0_125 = arith.constant 0 : index
    %460 = vector.load %arg6[%459, %c0_125] : memref<8x32xf32, #tpu.memory_space<vmem>>, vector<1x32xf32>
    tpu.vector_store %arg6[%459, %c0_125], %458 {strides = array<i32>} : memref<8x32xf32, #tpu.memory_space<vmem>>, vector<1x32xf32>,
    %c4_i32_126 = arith.constant 4 : i32
    %cst_127 = arith.constant 0xFF800000 : f32
    %461 = vector.broadcast %cst_127 : f32 to vector<1x32xf32>
    %c0_i32_128 = arith.constant 0 : i32
    %462 = arith.addi %0, %c4_i32_126 : i32
    %463 = arith.index_cast %462 : i32 to index
    %464 = arith.index_cast %c0_i32_128 : i32 to index
    %465 = memref.load %arg1[%463, %464] : memref<8x16xi32, #tpu.memory_space<smem>>
    %466 = arith.index_cast %465 : i32 to index
    %c0_129 = arith.constant 0 : index
    %467 = vector.load %arg2[%466, %c0_129] : memref<3072x32xf32, #tpu.memory_space<vmem>>, vector<1x32xf32>
    %468 = arith.maximumf %461, %467 : vector<1x32xf32>
    %c1_i32_130 = arith.constant 1 : i32
    %469 = arith.addi %0, %c4_i32_126 : i32
    %470 = arith.index_cast %469 : i32 to index
    %471 = arith.index_cast %c1_i32_130 : i32 to index
    %472 = memref.load %arg1[%470, %471] : memref<8x16xi32, #tpu.memory_space<smem>>
    %473 = arith.index_cast %472 : i32 to index
    %c0_131 = arith.constant 0 : index
    %474 = vector.load %arg2[%473, %c0_131] : memref<3072x32xf32, #tpu.memory_space<vmem>>, vector<1x32xf32>
    %475 = arith.maximumf %468, %474 : vector<1x32xf32>
    %c2_i32_132 = arith.constant 2 : i32
    %476 = arith.addi %0, %c4_i32_126 : i32
    %477 = arith.index_cast %476 : i32 to index
    %478 = arith.index_cast %c2_i32_132 : i32 to index
    %479 = memref.load %arg1[%477, %478] : memref<8x16xi32, #tpu.memory_space<smem>>
    %480 = arith.index_cast %479 : i32 to index
    %c0_133 = arith.constant 0 : index
    %481 = vector.load %arg2[%480, %c0_133] : memref<3072x32xf32, #tpu.memory_space<vmem>>, vector<1x32xf32>
    %482 = arith.maximumf %475, %481 : vector<1x32xf32>
    %c3_i32_134 = arith.constant 3 : i32
    %483 = arith.addi %0, %c4_i32_126 : i32
    %484 = arith.index_cast %483 : i32 to index
    %485 = arith.index_cast %c3_i32_134 : i32 to index
    %486 = memref.load %arg1[%484, %485] : memref<8x16xi32, #tpu.memory_space<smem>>
    %487 = arith.index_cast %486 : i32 to index
    %c0_135 = arith.constant 0 : index
    %488 = vector.load %arg2[%487, %c0_135] : memref<3072x32xf32, #tpu.memory_space<vmem>>, vector<1x32xf32>
    %489 = arith.maximumf %482, %488 : vector<1x32xf32>
    %c4_i32_136 = arith.constant 4 : i32
    %490 = arith.addi %0, %c4_i32_126 : i32
    %491 = arith.index_cast %490 : i32 to index
    %492 = arith.index_cast %c4_i32_136 : i32 to index
    %493 = memref.load %arg1[%491, %492] : memref<8x16xi32, #tpu.memory_space<smem>>
    %494 = arith.index_cast %493 : i32 to index
    %c0_137 = arith.constant 0 : index
    %495 = vector.load %arg2[%494, %c0_137] : memref<3072x32xf32, #tpu.memory_space<vmem>>, vector<1x32xf32>
    %496 = arith.maximumf %489, %495 : vector<1x32xf32>
    %c5_i32_138 = arith.constant 5 : i32
    %497 = arith.addi %0, %c4_i32_126 : i32
    %498 = arith.index_cast %497 : i32 to index
    %499 = arith.index_cast %c5_i32_138 : i32 to index
    %500 = memref.load %arg1[%498, %499] : memref<8x16xi32, #tpu.memory_space<smem>>
    %501 = arith.index_cast %500 : i32 to index
    %c0_139 = arith.constant 0 : index
    %502 = vector.load %arg2[%501, %c0_139] : memref<3072x32xf32, #tpu.memory_space<vmem>>, vector<1x32xf32>
    %503 = arith.maximumf %496, %502 : vector<1x32xf32>
    %c6_i32_140 = arith.constant 6 : i32
    %504 = arith.addi %0, %c4_i32_126 : i32
    %505 = arith.index_cast %504 : i32 to index
    %506 = arith.index_cast %c6_i32_140 : i32 to index
    %507 = memref.load %arg1[%505, %506] : memref<8x16xi32, #tpu.memory_space<smem>>
    %508 = arith.index_cast %507 : i32 to index
    %c0_141 = arith.constant 0 : index
    %509 = vector.load %arg2[%508, %c0_141] : memref<3072x32xf32, #tpu.memory_space<vmem>>, vector<1x32xf32>
    %510 = arith.maximumf %503, %509 : vector<1x32xf32>
    %c7_i32_142 = arith.constant 7 : i32
    %511 = arith.addi %0, %c4_i32_126 : i32
    %512 = arith.index_cast %511 : i32 to index
    %513 = arith.index_cast %c7_i32_142 : i32 to index
    %514 = memref.load %arg1[%512, %513] : memref<8x16xi32, #tpu.memory_space<smem>>
    %515 = arith.index_cast %514 : i32 to index
    %c0_143 = arith.constant 0 : index
    %516 = vector.load %arg2[%515, %c0_143] : memref<3072x32xf32, #tpu.memory_space<vmem>>, vector<1x32xf32>
    %517 = arith.maximumf %510, %516 : vector<1x32xf32>
    %c8_i32_144 = arith.constant 8 : i32
    %518 = arith.addi %0, %c4_i32_126 : i32
    %519 = arith.index_cast %518 : i32 to index
    %520 = arith.index_cast %c8_i32_144 : i32 to index
    %521 = memref.load %arg1[%519, %520] : memref<8x16xi32, #tpu.memory_space<smem>>
    %522 = arith.index_cast %521 : i32 to index
    %c0_145 = arith.constant 0 : index
    %523 = vector.load %arg2[%522, %c0_145] : memref<3072x32xf32, #tpu.memory_space<vmem>>, vector<1x32xf32>
    %524 = arith.maximumf %517, %523 : vector<1x32xf32>
    %c9_i32_146 = arith.constant 9 : i32
    %525 = arith.addi %0, %c4_i32_126 : i32
    %526 = arith.index_cast %525 : i32 to index
    %527 = arith.index_cast %c9_i32_146 : i32 to index
    %528 = memref.load %arg1[%526, %527] : memref<8x16xi32, #tpu.memory_space<smem>>
    %529 = arith.index_cast %528 : i32 to index
    %c0_147 = arith.constant 0 : index
    %530 = vector.load %arg2[%529, %c0_147] : memref<3072x32xf32, #tpu.memory_space<vmem>>, vector<1x32xf32>
    %531 = arith.maximumf %524, %530 : vector<1x32xf32>
    %c10_i32_148 = arith.constant 10 : i32
    %532 = arith.addi %0, %c4_i32_126 : i32
    %533 = arith.index_cast %532 : i32 to index
    %534 = arith.index_cast %c10_i32_148 : i32 to index
    %535 = memref.load %arg1[%533, %534] : memref<8x16xi32, #tpu.memory_space<smem>>
    %536 = arith.index_cast %535 : i32 to index
    %c0_149 = arith.constant 0 : index
    %537 = vector.load %arg2[%536, %c0_149] : memref<3072x32xf32, #tpu.memory_space<vmem>>, vector<1x32xf32>
    %538 = arith.maximumf %531, %537 : vector<1x32xf32>
    %c11_i32_150 = arith.constant 11 : i32
    %539 = arith.addi %0, %c4_i32_126 : i32
    %540 = arith.index_cast %539 : i32 to index
    %541 = arith.index_cast %c11_i32_150 : i32 to index
    %542 = memref.load %arg1[%540, %541] : memref<8x16xi32, #tpu.memory_space<smem>>
    %543 = arith.index_cast %542 : i32 to index
    %c0_151 = arith.constant 0 : index
    %544 = vector.load %arg2[%543, %c0_151] : memref<3072x32xf32, #tpu.memory_space<vmem>>, vector<1x32xf32>
    %545 = arith.maximumf %538, %544 : vector<1x32xf32>
    %c12_i32_152 = arith.constant 12 : i32
    %546 = arith.addi %0, %c4_i32_126 : i32
    %547 = arith.index_cast %546 : i32 to index
    %548 = arith.index_cast %c12_i32_152 : i32 to index
    %549 = memref.load %arg1[%547, %548] : memref<8x16xi32, #tpu.memory_space<smem>>
    %550 = arith.index_cast %549 : i32 to index
    %c0_153 = arith.constant 0 : index
    %551 = vector.load %arg2[%550, %c0_153] : memref<3072x32xf32, #tpu.memory_space<vmem>>, vector<1x32xf32>
    %552 = arith.maximumf %545, %551 : vector<1x32xf32>
    %c13_i32_154 = arith.constant 13 : i32
    %553 = arith.addi %0, %c4_i32_126 : i32
    %554 = arith.index_cast %553 : i32 to index
    %555 = arith.index_cast %c13_i32_154 : i32 to index
    %556 = memref.load %arg1[%554, %555] : memref<8x16xi32, #tpu.memory_space<smem>>
    %557 = arith.index_cast %556 : i32 to index
    %c0_155 = arith.constant 0 : index
    %558 = vector.load %arg2[%557, %c0_155] : memref<3072x32xf32, #tpu.memory_space<vmem>>, vector<1x32xf32>
    %559 = arith.maximumf %552, %558 : vector<1x32xf32>
    %c14_i32_156 = arith.constant 14 : i32
    %560 = arith.addi %0, %c4_i32_126 : i32
    %561 = arith.index_cast %560 : i32 to index
    %562 = arith.index_cast %c14_i32_156 : i32 to index
    %563 = memref.load %arg1[%561, %562] : memref<8x16xi32, #tpu.memory_space<smem>>
    %564 = arith.index_cast %563 : i32 to index
    %c0_157 = arith.constant 0 : index
    %565 = vector.load %arg2[%564, %c0_157] : memref<3072x32xf32, #tpu.memory_space<vmem>>, vector<1x32xf32>
    %566 = arith.maximumf %559, %565 : vector<1x32xf32>
    %c15_i32_158 = arith.constant 15 : i32
    %567 = arith.addi %0, %c4_i32_126 : i32
    %568 = arith.index_cast %567 : i32 to index
    %569 = arith.index_cast %c15_i32_158 : i32 to index
    %570 = memref.load %arg1[%568, %569] : memref<8x16xi32, #tpu.memory_space<smem>>
    %571 = arith.index_cast %570 : i32 to index
    %c0_159 = arith.constant 0 : index
    %572 = vector.load %arg2[%571, %c0_159] : memref<3072x32xf32, #tpu.memory_space<vmem>>, vector<1x32xf32>
    %573 = arith.maximumf %566, %572 : vector<1x32xf32>
    %c16_i32_160 = arith.constant 16 : i32
    %574 = arith.index_cast %c4_i32_126 : i32 to index
    %c0_161 = arith.constant 0 : index
    %575 = vector.load %arg6[%574, %c0_161] : memref<8x32xf32, #tpu.memory_space<vmem>>, vector<1x32xf32>
    tpu.vector_store %arg6[%574, %c0_161], %573 {strides = array<i32>} : memref<8x32xf32, #tpu.memory_space<vmem>>, vector<1x32xf32>,
    %c5_i32_162 = arith.constant 5 : i32
    %cst_163 = arith.constant 0xFF800000 : f32
    %576 = vector.broadcast %cst_163 : f32 to vector<1x32xf32>
    %c0_i32_164 = arith.constant 0 : i32
    %577 = arith.addi %0, %c5_i32_162 : i32
    %578 = arith.index_cast %577 : i32 to index
    %579 = arith.index_cast %c0_i32_164 : i32 to index
    %580 = memref.load %arg1[%578, %579] : memref<8x16xi32, #tpu.memory_space<smem>>
    %581 = arith.index_cast %580 : i32 to index
    %c0_165 = arith.constant 0 : index
    %582 = vector.load %arg2[%581, %c0_165] : memref<3072x32xf32, #tpu.memory_space<vmem>>, vector<1x32xf32>
    %583 = arith.maximumf %576, %582 : vector<1x32xf32>
    %c1_i32_166 = arith.constant 1 : i32
    %584 = arith.addi %0, %c5_i32_162 : i32
    %585 = arith.index_cast %584 : i32 to index
    %586 = arith.index_cast %c1_i32_166 : i32 to index
    %587 = memref.load %arg1[%585, %586] : memref<8x16xi32, #tpu.memory_space<smem>>
    %588 = arith.index_cast %587 : i32 to index
    %c0_167 = arith.constant 0 : index
    %589 = vector.load %arg2[%588, %c0_167] : memref<3072x32xf32, #tpu.memory_space<vmem>>, vector<1x32xf32>
    %590 = arith.maximumf %583, %589 : vector<1x32xf32>
    %c2_i32_168 = arith.constant 2 : i32
    %591 = arith.addi %0, %c5_i32_162 : i32
    %592 = arith.index_cast %591 : i32 to index
    %593 = arith.index_cast %c2_i32_168 : i32 to index
    %594 = memref.load %arg1[%592, %593] : memref<8x16xi32, #tpu.memory_space<smem>>
    %595 = arith.index_cast %594 : i32 to index
    %c0_169 = arith.constant 0 : index
    %596 = vector.load %arg2[%595, %c0_169] : memref<3072x32xf32, #tpu.memory_space<vmem>>, vector<1x32xf32>
    %597 = arith.maximumf %590, %596 : vector<1x32xf32>
    %c3_i32_170 = arith.constant 3 : i32
    %598 = arith.addi %0, %c5_i32_162 : i32
    %599 = arith.index_cast %598 : i32 to index
    %600 = arith.index_cast %c3_i32_170 : i32 to index
    %601 = memref.load %arg1[%599, %600] : memref<8x16xi32, #tpu.memory_space<smem>>
    %602 = arith.index_cast %601 : i32 to index
    %c0_171 = arith.constant 0 : index
    %603 = vector.load %arg2[%602, %c0_171] : memref<3072x32xf32, #tpu.memory_space<vmem>>, vector<1x32xf32>
    %604 = arith.maximumf %597, %603 : vector<1x32xf32>
    %c4_i32_172 = arith.constant 4 : i32
    %605 = arith.addi %0, %c5_i32_162 : i32
    %606 = arith.index_cast %605 : i32 to index
    %607 = arith.index_cast %c4_i32_172 : i32 to index
    %608 = memref.load %arg1[%606, %607] : memref<8x16xi32, #tpu.memory_space<smem>>
    %609 = arith.index_cast %608 : i32 to index
    %c0_173 = arith.constant 0 : index
    %610 = vector.load %arg2[%609, %c0_173] : memref<3072x32xf32, #tpu.memory_space<vmem>>, vector<1x32xf32>
    %611 = arith.maximumf %604, %610 : vector<1x32xf32>
    %c5_i32_174 = arith.constant 5 : i32
    %612 = arith.addi %0, %c5_i32_162 : i32
    %613 = arith.index_cast %612 : i32 to index
    %614 = arith.index_cast %c5_i32_174 : i32 to index
    %615 = memref.load %arg1[%613, %614] : memref<8x16xi32, #tpu.memory_space<smem>>
    %616 = arith.index_cast %615 : i32 to index
    %c0_175 = arith.constant 0 : index
    %617 = vector.load %arg2[%616, %c0_175] : memref<3072x32xf32, #tpu.memory_space<vmem>>, vector<1x32xf32>
    %618 = arith.maximumf %611, %617 : vector<1x32xf32>
    %c6_i32_176 = arith.constant 6 : i32
    %619 = arith.addi %0, %c5_i32_162 : i32
    %620 = arith.index_cast %619 : i32 to index
    %621 = arith.index_cast %c6_i32_176 : i32 to index
    %622 = memref.load %arg1[%620, %621] : memref<8x16xi32, #tpu.memory_space<smem>>
    %623 = arith.index_cast %622 : i32 to index
    %c0_177 = arith.constant 0 : index
    %624 = vector.load %arg2[%623, %c0_177] : memref<3072x32xf32, #tpu.memory_space<vmem>>, vector<1x32xf32>
    %625 = arith.maximumf %618, %624 : vector<1x32xf32>
    %c7_i32_178 = arith.constant 7 : i32
    %626 = arith.addi %0, %c5_i32_162 : i32
    %627 = arith.index_cast %626 : i32 to index
    %628 = arith.index_cast %c7_i32_178 : i32 to index
    %629 = memref.load %arg1[%627, %628] : memref<8x16xi32, #tpu.memory_space<smem>>
    %630 = arith.index_cast %629 : i32 to index
    %c0_179 = arith.constant 0 : index
    %631 = vector.load %arg2[%630, %c0_179] : memref<3072x32xf32, #tpu.memory_space<vmem>>, vector<1x32xf32>
    %632 = arith.maximumf %625, %631 : vector<1x32xf32>
    %c8_i32_180 = arith.constant 8 : i32
    %633 = arith.addi %0, %c5_i32_162 : i32
    %634 = arith.index_cast %633 : i32 to index
    %635 = arith.index_cast %c8_i32_180 : i32 to index
    %636 = memref.load %arg1[%634, %635] : memref<8x16xi32, #tpu.memory_space<smem>>
    %637 = arith.index_cast %636 : i32 to index
    %c0_181 = arith.constant 0 : index
    %638 = vector.load %arg2[%637, %c0_181] : memref<3072x32xf32, #tpu.memory_space<vmem>>, vector<1x32xf32>
    %639 = arith.maximumf %632, %638 : vector<1x32xf32>
    %c9_i32_182 = arith.constant 9 : i32
    %640 = arith.addi %0, %c5_i32_162 : i32
    %641 = arith.index_cast %640 : i32 to index
    %642 = arith.index_cast %c9_i32_182 : i32 to index
    %643 = memref.load %arg1[%641, %642] : memref<8x16xi32, #tpu.memory_space<smem>>
    %644 = arith.index_cast %643 : i32 to index
    %c0_183 = arith.constant 0 : index
    %645 = vector.load %arg2[%644, %c0_183] : memref<3072x32xf32, #tpu.memory_space<vmem>>, vector<1x32xf32>
    %646 = arith.maximumf %639, %645 : vector<1x32xf32>
    %c10_i32_184 = arith.constant 10 : i32
    %647 = arith.addi %0, %c5_i32_162 : i32
    %648 = arith.index_cast %647 : i32 to index
    %649 = arith.index_cast %c10_i32_184 : i32 to index
    %650 = memref.load %arg1[%648, %649] : memref<8x16xi32, #tpu.memory_space<smem>>
    %651 = arith.index_cast %650 : i32 to index
    %c0_185 = arith.constant 0 : index
    %652 = vector.load %arg2[%651, %c0_185] : memref<3072x32xf32, #tpu.memory_space<vmem>>, vector<1x32xf32>
    %653 = arith.maximumf %646, %652 : vector<1x32xf32>
    %c11_i32_186 = arith.constant 11 : i32
    %654 = arith.addi %0, %c5_i32_162 : i32
    %655 = arith.index_cast %654 : i32 to index
    %656 = arith.index_cast %c11_i32_186 : i32 to index
    %657 = memref.load %arg1[%655, %656] : memref<8x16xi32, #tpu.memory_space<smem>>
    %658 = arith.index_cast %657 : i32 to index
    %c0_187 = arith.constant 0 : index
    %659 = vector.load %arg2[%658, %c0_187] : memref<3072x32xf32, #tpu.memory_space<vmem>>, vector<1x32xf32>
    %660 = arith.maximumf %653, %659 : vector<1x32xf32>
    %c12_i32_188 = arith.constant 12 : i32
    %661 = arith.addi %0, %c5_i32_162 : i32
    %662 = arith.index_cast %661 : i32 to index
    %663 = arith.index_cast %c12_i32_188 : i32 to index
    %664 = memref.load %arg1[%662, %663] : memref<8x16xi32, #tpu.memory_space<smem>>
    %665 = arith.index_cast %664 : i32 to index
    %c0_189 = arith.constant 0 : index
    %666 = vector.load %arg2[%665, %c0_189] : memref<3072x32xf32, #tpu.memory_space<vmem>>, vector<1x32xf32>
    %667 = arith.maximumf %660, %666 : vector<1x32xf32>
    %c13_i32_190 = arith.constant 13 : i32
    %668 = arith.addi %0, %c5_i32_162 : i32
    %669 = arith.index_cast %668 : i32 to index
    %670 = arith.index_cast %c13_i32_190 : i32 to index
    %671 = memref.load %arg1[%669, %670] : memref<8x16xi32, #tpu.memory_space<smem>>
    %672 = arith.index_cast %671 : i32 to index
    %c0_191 = arith.constant 0 : index
    %673 = vector.load %arg2[%672, %c0_191] : memref<3072x32xf32, #tpu.memory_space<vmem>>, vector<1x32xf32>
    %674 = arith.maximumf %667, %673 : vector<1x32xf32>
    %c14_i32_192 = arith.constant 14 : i32
    %675 = arith.addi %0, %c5_i32_162 : i32
    %676 = arith.index_cast %675 : i32 to index
    %677 = arith.index_cast %c14_i32_192 : i32 to index
    %678 = memref.load %arg1[%676, %677] : memref<8x16xi32, #tpu.memory_space<smem>>
    %679 = arith.index_cast %678 : i32 to index
    %c0_193 = arith.constant 0 : index
    %680 = vector.load %arg2[%679, %c0_193] : memref<3072x32xf32, #tpu.memory_space<vmem>>, vector<1x32xf32>
    %681 = arith.maximumf %674, %680 : vector<1x32xf32>
    %c15_i32_194 = arith.constant 15 : i32
    %682 = arith.addi %0, %c5_i32_162 : i32
    %683 = arith.index_cast %682 : i32 to index
    %684 = arith.index_cast %c15_i32_194 : i32 to index
    %685 = memref.load %arg1[%683, %684] : memref<8x16xi32, #tpu.memory_space<smem>>
    %686 = arith.index_cast %685 : i32 to index
    %c0_195 = arith.constant 0 : index
    %687 = vector.load %arg2[%686, %c0_195] : memref<3072x32xf32, #tpu.memory_space<vmem>>, vector<1x32xf32>
    %688 = arith.maximumf %681, %687 : vector<1x32xf32>
    %c16_i32_196 = arith.constant 16 : i32
    %689 = arith.index_cast %c5_i32_162 : i32 to index
    %c0_197 = arith.constant 0 : index
    %690 = vector.load %arg6[%689, %c0_197] : memref<8x32xf32, #tpu.memory_space<vmem>>, vector<1x32xf32>
    tpu.vector_store %arg6[%689, %c0_197], %688 {strides = array<i32>} : memref<8x32xf32, #tpu.memory_space<vmem>>, vector<1x32xf32>,
    %c6_i32_198 = arith.constant 6 : i32
    %cst_199 = arith.constant 0xFF800000 : f32
    %691 = vector.broadcast %cst_199 : f32 to vector<1x32xf32>
    %c0_i32_200 = arith.constant 0 : i32
    %692 = arith.addi %0, %c6_i32_198 : i32
    %693 = arith.index_cast %692 : i32 to index
    %694 = arith.index_cast %c0_i32_200 : i32 to index
    %695 = memref.load %arg1[%693, %694] : memref<8x16xi32, #tpu.memory_space<smem>>
    %696 = arith.index_cast %695 : i32 to index
    %c0_201 = arith.constant 0 : index
    %697 = vector.load %arg2[%696, %c0_201] : memref<3072x32xf32, #tpu.memory_space<vmem>>, vector<1x32xf32>
    %698 = arith.maximumf %691, %697 : vector<1x32xf32>
    %c1_i32_202 = arith.constant 1 : i32
    %699 = arith.addi %0, %c6_i32_198 : i32
    %700 = arith.index_cast %699 : i32 to index
    %701 = arith.index_cast %c1_i32_202 : i32 to index
    %702 = memref.load %arg1[%700, %701] : memref<8x16xi32, #tpu.memory_space<smem>>
    %703 = arith.index_cast %702 : i32 to index
    %c0_203 = arith.constant 0 : index
    %704 = vector.load %arg2[%703, %c0_203] : memref<3072x32xf32, #tpu.memory_space<vmem>>, vector<1x32xf32>
    %705 = arith.maximumf %698, %704 : vector<1x32xf32>
    %c2_i32_204 = arith.constant 2 : i32
    %706 = arith.addi %0, %c6_i32_198 : i32
    %707 = arith.index_cast %706 : i32 to index
    %708 = arith.index_cast %c2_i32_204 : i32 to index
    %709 = memref.load %arg1[%707, %708] : memref<8x16xi32, #tpu.memory_space<smem>>
    %710 = arith.index_cast %709 : i32 to index
    %c0_205 = arith.constant 0 : index
    %711 = vector.load %arg2[%710, %c0_205] : memref<3072x32xf32, #tpu.memory_space<vmem>>, vector<1x32xf32>
    %712 = arith.maximumf %705, %711 : vector<1x32xf32>
    %c3_i32_206 = arith.constant 3 : i32
    %713 = arith.addi %0, %c6_i32_198 : i32
    %714 = arith.index_cast %713 : i32 to index
    %715 = arith.index_cast %c3_i32_206 : i32 to index
    %716 = memref.load %arg1[%714, %715] : memref<8x16xi32, #tpu.memory_space<smem>>
    %717 = arith.index_cast %716 : i32 to index
    %c0_207 = arith.constant 0 : index
    %718 = vector.load %arg2[%717, %c0_207] : memref<3072x32xf32, #tpu.memory_space<vmem>>, vector<1x32xf32>
    %719 = arith.maximumf %712, %718 : vector<1x32xf32>
    %c4_i32_208 = arith.constant 4 : i32
    %720 = arith.addi %0, %c6_i32_198 : i32
    %721 = arith.index_cast %720 : i32 to index
    %722 = arith.index_cast %c4_i32_208 : i32 to index
    %723 = memref.load %arg1[%721, %722] : memref<8x16xi32, #tpu.memory_space<smem>>
    %724 = arith.index_cast %723 : i32 to index
    %c0_209 = arith.constant 0 : index
    %725 = vector.load %arg2[%724, %c0_209] : memref<3072x32xf32, #tpu.memory_space<vmem>>, vector<1x32xf32>
    %726 = arith.maximumf %719, %725 : vector<1x32xf32>
    %c5_i32_210 = arith.constant 5 : i32
    %727 = arith.addi %0, %c6_i32_198 : i32
    %728 = arith.index_cast %727 : i32 to index
    %729 = arith.index_cast %c5_i32_210 : i32 to index
    %730 = memref.load %arg1[%728, %729] : memref<8x16xi32, #tpu.memory_space<smem>>
    %731 = arith.index_cast %730 : i32 to index
    %c0_211 = arith.constant 0 : index
    %732 = vector.load %arg2[%731, %c0_211] : memref<3072x32xf32, #tpu.memory_space<vmem>>, vector<1x32xf32>
    %733 = arith.maximumf %726, %732 : vector<1x32xf32>
    %c6_i32_212 = arith.constant 6 : i32
    %734 = arith.addi %0, %c6_i32_198 : i32
    %735 = arith.index_cast %734 : i32 to index
    %736 = arith.index_cast %c6_i32_212 : i32 to index
    %737 = memref.load %arg1[%735, %736] : memref<8x16xi32, #tpu.memory_space<smem>>
    %738 = arith.index_cast %737 : i32 to index
    %c0_213 = arith.constant 0 : index
    %739 = vector.load %arg2[%738, %c0_213] : memref<3072x32xf32, #tpu.memory_space<vmem>>, vector<1x32xf32>
    %740 = arith.maximumf %733, %739 : vector<1x32xf32>
    %c7_i32_214 = arith.constant 7 : i32
    %741 = arith.addi %0, %c6_i32_198 : i32
    %742 = arith.index_cast %741 : i32 to index
    %743 = arith.index_cast %c7_i32_214 : i32 to index
    %744 = memref.load %arg1[%742, %743] : memref<8x16xi32, #tpu.memory_space<smem>>
    %745 = arith.index_cast %744 : i32 to index
    %c0_215 = arith.constant 0 : index
    %746 = vector.load %arg2[%745, %c0_215] : memref<3072x32xf32, #tpu.memory_space<vmem>>, vector<1x32xf32>
    %747 = arith.maximumf %740, %746 : vector<1x32xf32>
    %c8_i32_216 = arith.constant 8 : i32
    %748 = arith.addi %0, %c6_i32_198 : i32
    %749 = arith.index_cast %748 : i32 to index
    %750 = arith.index_cast %c8_i32_216 : i32 to index
    %751 = memref.load %arg1[%749, %750] : memref<8x16xi32, #tpu.memory_space<smem>>
    %752 = arith.index_cast %751 : i32 to index
    %c0_217 = arith.constant 0 : index
    %753 = vector.load %arg2[%752, %c0_217] : memref<3072x32xf32, #tpu.memory_space<vmem>>, vector<1x32xf32>
    %754 = arith.maximumf %747, %753 : vector<1x32xf32>
    %c9_i32_218 = arith.constant 9 : i32
    %755 = arith.addi %0, %c6_i32_198 : i32
    %756 = arith.index_cast %755 : i32 to index
    %757 = arith.index_cast %c9_i32_218 : i32 to index
    %758 = memref.load %arg1[%756, %757] : memref<8x16xi32, #tpu.memory_space<smem>>
    %759 = arith.index_cast %758 : i32 to index
    %c0_219 = arith.constant 0 : index
    %760 = vector.load %arg2[%759, %c0_219] : memref<3072x32xf32, #tpu.memory_space<vmem>>, vector<1x32xf32>
    %761 = arith.maximumf %754, %760 : vector<1x32xf32>
    %c10_i32_220 = arith.constant 10 : i32
    %762 = arith.addi %0, %c6_i32_198 : i32
    %763 = arith.index_cast %762 : i32 to index
    %764 = arith.index_cast %c10_i32_220 : i32 to index
    %765 = memref.load %arg1[%763, %764] : memref<8x16xi32, #tpu.memory_space<smem>>
    %766 = arith.index_cast %765 : i32 to index
    %c0_221 = arith.constant 0 : index
    %767 = vector.load %arg2[%766, %c0_221] : memref<3072x32xf32, #tpu.memory_space<vmem>>, vector<1x32xf32>
    %768 = arith.maximumf %761, %767 : vector<1x32xf32>
    %c11_i32_222 = arith.constant 11 : i32
    %769 = arith.addi %0, %c6_i32_198 : i32
    %770 = arith.index_cast %769 : i32 to index
    %771 = arith.index_cast %c11_i32_222 : i32 to index
    %772 = memref.load %arg1[%770, %771] : memref<8x16xi32, #tpu.memory_space<smem>>
    %773 = arith.index_cast %772 : i32 to index
    %c0_223 = arith.constant 0 : index
    %774 = vector.load %arg2[%773, %c0_223] : memref<3072x32xf32, #tpu.memory_space<vmem>>, vector<1x32xf32>
    %775 = arith.maximumf %768, %774 : vector<1x32xf32>
    %c12_i32_224 = arith.constant 12 : i32
    %776 = arith.addi %0, %c6_i32_198 : i32
    %777 = arith.index_cast %776 : i32 to index
    %778 = arith.index_cast %c12_i32_224 : i32 to index
    %779 = memref.load %arg1[%777, %778] : memref<8x16xi32, #tpu.memory_space<smem>>
    %780 = arith.index_cast %779 : i32 to index
    %c0_225 = arith.constant 0 : index
    %781 = vector.load %arg2[%780, %c0_225] : memref<3072x32xf32, #tpu.memory_space<vmem>>, vector<1x32xf32>
    %782 = arith.maximumf %775, %781 : vector<1x32xf32>
    %c13_i32_226 = arith.constant 13 : i32
    %783 = arith.addi %0, %c6_i32_198 : i32
    %784 = arith.index_cast %783 : i32 to index
    %785 = arith.index_cast %c13_i32_226 : i32 to index
    %786 = memref.load %arg1[%784, %785] : memref<8x16xi32, #tpu.memory_space<smem>>
    %787 = arith.index_cast %786 : i32 to index
    %c0_227 = arith.constant 0 : index
    %788 = vector.load %arg2[%787, %c0_227] : memref<3072x32xf32, #tpu.memory_space<vmem>>, vector<1x32xf32>
    %789 = arith.maximumf %782, %788 : vector<1x32xf32>
    %c14_i32_228 = arith.constant 14 : i32
    %790 = arith.addi %0, %c6_i32_198 : i32
    %791 = arith.index_cast %790 : i32 to index
    %792 = arith.index_cast %c14_i32_228 : i32 to index
    %793 = memref.load %arg1[%791, %792] : memref<8x16xi32, #tpu.memory_space<smem>>
    %794 = arith.index_cast %793 : i32 to index
    %c0_229 = arith.constant 0 : index
    %795 = vector.load %arg2[%794, %c0_229] : memref<3072x32xf32, #tpu.memory_space<vmem>>, vector<1x32xf32>
    %796 = arith.maximumf %789, %795 : vector<1x32xf32>
    %c15_i32_230 = arith.constant 15 : i32
    %797 = arith.addi %0, %c6_i32_198 : i32
    %798 = arith.index_cast %797 : i32 to index
    %799 = arith.index_cast %c15_i32_230 : i32 to index
    %800 = memref.load %arg1[%798, %799] : memref<8x16xi32, #tpu.memory_space<smem>>
    %801 = arith.index_cast %800 : i32 to index
    %c0_231 = arith.constant 0 : index
    %802 = vector.load %arg2[%801, %c0_231] : memref<3072x32xf32, #tpu.memory_space<vmem>>, vector<1x32xf32>
    %803 = arith.maximumf %796, %802 : vector<1x32xf32>
    %c16_i32_232 = arith.constant 16 : i32
    %804 = arith.index_cast %c6_i32_198 : i32 to index
    %c0_233 = arith.constant 0 : index
    %805 = vector.load %arg6[%804, %c0_233] : memref<8x32xf32, #tpu.memory_space<vmem>>, vector<1x32xf32>
    tpu.vector_store %arg6[%804, %c0_233], %803 {strides = array<i32>} : memref<8x32xf32, #tpu.memory_space<vmem>>, vector<1x32xf32>,
    %c7_i32_234 = arith.constant 7 : i32
    %cst_235 = arith.constant 0xFF800000 : f32
    %806 = vector.broadcast %cst_235 : f32 to vector<1x32xf32>
    %c0_i32_236 = arith.constant 0 : i32
    %807 = arith.addi %0, %c7_i32_234 : i32
    %808 = arith.index_cast %807 : i32 to index
    %809 = arith.index_cast %c0_i32_236 : i32 to index
    %810 = memref.load %arg1[%808, %809] : memref<8x16xi32, #tpu.memory_space<smem>>
    %811 = arith.index_cast %810 : i32 to index
    %c0_237 = arith.constant 0 : index
    %812 = vector.load %arg2[%811, %c0_237] : memref<3072x32xf32, #tpu.memory_space<vmem>>, vector<1x32xf32>
    %813 = arith.maximumf %806, %812 : vector<1x32xf32>
    %c1_i32_238 = arith.constant 1 : i32
    %814 = arith.addi %0, %c7_i32_234 : i32
    %815 = arith.index_cast %814 : i32 to index
    %816 = arith.index_cast %c1_i32_238 : i32 to index
    %817 = memref.load %arg1[%815, %816] : memref<8x16xi32, #tpu.memory_space<smem>>
    %818 = arith.index_cast %817 : i32 to index
    %c0_239 = arith.constant 0 : index
    %819 = vector.load %arg2[%818, %c0_239] : memref<3072x32xf32, #tpu.memory_space<vmem>>, vector<1x32xf32>
    %820 = arith.maximumf %813, %819 : vector<1x32xf32>
    %c2_i32_240 = arith.constant 2 : i32
    %821 = arith.addi %0, %c7_i32_234 : i32
    %822 = arith.index_cast %821 : i32 to index
    %823 = arith.index_cast %c2_i32_240 : i32 to index
    %824 = memref.load %arg1[%822, %823] : memref<8x16xi32, #tpu.memory_space<smem>>
    %825 = arith.index_cast %824 : i32 to index
    %c0_241 = arith.constant 0 : index
    %826 = vector.load %arg2[%825, %c0_241] : memref<3072x32xf32, #tpu.memory_space<vmem>>, vector<1x32xf32>
    %827 = arith.maximumf %820, %826 : vector<1x32xf32>
    %c3_i32_242 = arith.constant 3 : i32
    %828 = arith.addi %0, %c7_i32_234 : i32
    %829 = arith.index_cast %828 : i32 to index
    %830 = arith.index_cast %c3_i32_242 : i32 to index
    %831 = memref.load %arg1[%829, %830] : memref<8x16xi32, #tpu.memory_space<smem>>
    %832 = arith.index_cast %831 : i32 to index
    %c0_243 = arith.constant 0 : index
    %833 = vector.load %arg2[%832, %c0_243] : memref<3072x32xf32, #tpu.memory_space<vmem>>, vector<1x32xf32>
    %834 = arith.maximumf %827, %833 : vector<1x32xf32>
    %c4_i32_244 = arith.constant 4 : i32
    %835 = arith.addi %0, %c7_i32_234 : i32
    %836 = arith.index_cast %835 : i32 to index
    %837 = arith.index_cast %c4_i32_244 : i32 to index
    %838 = memref.load %arg1[%836, %837] : memref<8x16xi32, #tpu.memory_space<smem>>
    %839 = arith.index_cast %838 : i32 to index
    %c0_245 = arith.constant 0 : index
    %840 = vector.load %arg2[%839, %c0_245] : memref<3072x32xf32, #tpu.memory_space<vmem>>, vector<1x32xf32>
    %841 = arith.maximumf %834, %840 : vector<1x32xf32>
    %c5_i32_246 = arith.constant 5 : i32
    %842 = arith.addi %0, %c7_i32_234 : i32
    %843 = arith.index_cast %842 : i32 to index
    %844 = arith.index_cast %c5_i32_246 : i32 to index
    %845 = memref.load %arg1[%843, %844] : memref<8x16xi32, #tpu.memory_space<smem>>
    %846 = arith.index_cast %845 : i32 to index
    %c0_247 = arith.constant 0 : index
    %847 = vector.load %arg2[%846, %c0_247] : memref<3072x32xf32, #tpu.memory_space<vmem>>, vector<1x32xf32>
    %848 = arith.maximumf %841, %847 : vector<1x32xf32>
    %c6_i32_248 = arith.constant 6 : i32
    %849 = arith.addi %0, %c7_i32_234 : i32
    %850 = arith.index_cast %849 : i32 to index
    %851 = arith.index_cast %c6_i32_248 : i32 to index
    %852 = memref.load %arg1[%850, %851] : memref<8x16xi32, #tpu.memory_space<smem>>
    %853 = arith.index_cast %852 : i32 to index
    %c0_249 = arith.constant 0 : index
    %854 = vector.load %arg2[%853, %c0_249] : memref<3072x32xf32, #tpu.memory_space<vmem>>, vector<1x32xf32>
    %855 = arith.maximumf %848, %854 : vector<1x32xf32>
    %c7_i32_250 = arith.constant 7 : i32
    %856 = arith.addi %0, %c7_i32_234 : i32
    %857 = arith.index_cast %856 : i32 to index
    %858 = arith.index_cast %c7_i32_250 : i32 to index
    %859 = memref.load %arg1[%857, %858] : memref<8x16xi32, #tpu.memory_space<smem>>
    %860 = arith.index_cast %859 : i32 to index
    %c0_251 = arith.constant 0 : index
    %861 = vector.load %arg2[%860, %c0_251] : memref<3072x32xf32, #tpu.memory_space<vmem>>, vector<1x32xf32>
    %862 = arith.maximumf %855, %861 : vector<1x32xf32>
    %c8_i32_252 = arith.constant 8 : i32
    %863 = arith.addi %0, %c7_i32_234 : i32
    %864 = arith.index_cast %863 : i32 to index
    %865 = arith.index_cast %c8_i32_252 : i32 to index
    %866 = memref.load %arg1[%864, %865] : memref<8x16xi32, #tpu.memory_space<smem>>
    %867 = arith.index_cast %866 : i32 to index
    %c0_253 = arith.constant 0 : index
    %868 = vector.load %arg2[%867, %c0_253] : memref<3072x32xf32, #tpu.memory_space<vmem>>, vector<1x32xf32>
    %869 = arith.maximumf %862, %868 : vector<1x32xf32>
    %c9_i32_254 = arith.constant 9 : i32
    %870 = arith.addi %0, %c7_i32_234 : i32
    %871 = arith.index_cast %870 : i32 to index
    %872 = arith.index_cast %c9_i32_254 : i32 to index
    %873 = memref.load %arg1[%871, %872] : memref<8x16xi32, #tpu.memory_space<smem>>
    %874 = arith.index_cast %873 : i32 to index
    %c0_255 = arith.constant 0 : index
    %875 = vector.load %arg2[%874, %c0_255] : memref<3072x32xf32, #tpu.memory_space<vmem>>, vector<1x32xf32>
    %876 = arith.maximumf %869, %875 : vector<1x32xf32>
    %c10_i32_256 = arith.constant 10 : i32
    %877 = arith.addi %0, %c7_i32_234 : i32
    %878 = arith.index_cast %877 : i32 to index
    %879 = arith.index_cast %c10_i32_256 : i32 to index
    %880 = memref.load %arg1[%878, %879] : memref<8x16xi32, #tpu.memory_space<smem>>
    %881 = arith.index_cast %880 : i32 to index
    %c0_257 = arith.constant 0 : index
    %882 = vector.load %arg2[%881, %c0_257] : memref<3072x32xf32, #tpu.memory_space<vmem>>, vector<1x32xf32>
    %883 = arith.maximumf %876, %882 : vector<1x32xf32>
    %c11_i32_258 = arith.constant 11 : i32
    %884 = arith.addi %0, %c7_i32_234 : i32
    %885 = arith.index_cast %884 : i32 to index
    %886 = arith.index_cast %c11_i32_258 : i32 to index
    %887 = memref.load %arg1[%885, %886] : memref<8x16xi32, #tpu.memory_space<smem>>
    %888 = arith.index_cast %887 : i32 to index
    %c0_259 = arith.constant 0 : index
    %889 = vector.load %arg2[%888, %c0_259] : memref<3072x32xf32, #tpu.memory_space<vmem>>, vector<1x32xf32>
    %890 = arith.maximumf %883, %889 : vector<1x32xf32>
    %c12_i32_260 = arith.constant 12 : i32
    %891 = arith.addi %0, %c7_i32_234 : i32
    %892 = arith.index_cast %891 : i32 to index
    %893 = arith.index_cast %c12_i32_260 : i32 to index
    %894 = memref.load %arg1[%892, %893] : memref<8x16xi32, #tpu.memory_space<smem>>
    %895 = arith.index_cast %894 : i32 to index
    %c0_261 = arith.constant 0 : index
    %896 = vector.load %arg2[%895, %c0_261] : memref<3072x32xf32, #tpu.memory_space<vmem>>, vector<1x32xf32>
    %897 = arith.maximumf %890, %896 : vector<1x32xf32>
    %c13_i32_262 = arith.constant 13 : i32
    %898 = arith.addi %0, %c7_i32_234 : i32
    %899 = arith.index_cast %898 : i32 to index
    %900 = arith.index_cast %c13_i32_262 : i32 to index
    %901 = memref.load %arg1[%899, %900] : memref<8x16xi32, #tpu.memory_space<smem>>
    %902 = arith.index_cast %901 : i32 to index
    %c0_263 = arith.constant 0 : index
    %903 = vector.load %arg2[%902, %c0_263] : memref<3072x32xf32, #tpu.memory_space<vmem>>, vector<1x32xf32>
    %904 = arith.maximumf %897, %903 : vector<1x32xf32>
    %c14_i32_264 = arith.constant 14 : i32
    %905 = arith.addi %0, %c7_i32_234 : i32
    %906 = arith.index_cast %905 : i32 to index
    %907 = arith.index_cast %c14_i32_264 : i32 to index
    %908 = memref.load %arg1[%906, %907] : memref<8x16xi32, #tpu.memory_space<smem>>
    %909 = arith.index_cast %908 : i32 to index
    %c0_265 = arith.constant 0 : index
    %910 = vector.load %arg2[%909, %c0_265] : memref<3072x32xf32, #tpu.memory_space<vmem>>, vector<1x32xf32>
    %911 = arith.maximumf %904, %910 : vector<1x32xf32>
    %c15_i32_266 = arith.constant 15 : i32
    %912 = arith.addi %0, %c7_i32_234 : i32
    %913 = arith.index_cast %912 : i32 to index
    %914 = arith.index_cast %c15_i32_266 : i32 to index
    %915 = memref.load %arg1[%913, %914] : memref<8x16xi32, #tpu.memory_space<smem>>
    %916 = arith.index_cast %915 : i32 to index
    %c0_267 = arith.constant 0 : index
    %917 = vector.load %arg2[%916, %c0_267] : memref<3072x32xf32, #tpu.memory_space<vmem>>, vector<1x32xf32>
    %918 = arith.maximumf %911, %917 : vector<1x32xf32>
    %c16_i32_268 = arith.constant 16 : i32
    %919 = arith.index_cast %c7_i32_234 : i32 to index
    %c0_269 = arith.constant 0 : index
    %920 = vector.load %arg6[%919, %c0_269] : memref<8x32xf32, #tpu.memory_space<vmem>>, vector<1x32xf32>
    tpu.vector_store %arg6[%919, %c0_269], %918 {strides = array<i32>} : memref<8x32xf32, #tpu.memory_space<vmem>>, vector<1x32xf32>,
    %c8_i32_270 = arith.constant 8 : i32
    %c0_271 = arith.constant 0 : index
    %c0_272 = arith.constant 0 : index
    %921 = vector.load %arg6[%c0_271, %c0_272] : memref<8x32xf32, #tpu.memory_space<vmem>>, vector<8x32xf32>
    %c0_273 = arith.constant 0 : index
    %c0_274 = arith.constant 0 : index
    %922 = vector.load %arg3[%c0_273, %c0_274] : memref<32x4xf32, #tpu.memory_space<vmem>>, vector<32x4xf32>
    %cst_275 = arith.constant dense<0.000000e+00> : vector<8x4xf32>
    %923 = tpu.matmul %921, %922, %cst_275 {dimension_numbers = #tpu.dot_dimension_numbers<[1], [0], [0], [1], [0, 0, 1, 1], [], []>} : vector<8x32xf32>, vector<32x4xf32>, vector<8x4xf32> -> vector<8x4xf32>
    %c0_276 = arith.constant 0 : index
    %c0_277 = arith.constant 0 : index
    %924 = vector.load %arg4[%c0_276, %c0_277] : memref<1x4xf32, #tpu.memory_space<vmem>>, vector<1x4xf32>
    %925 = vector.broadcast %924 : vector<1x4xf32> to vector<8x4xf32>
    %926 = arith.addf %923, %925 : vector<8x4xf32>
    %cst_278 = arith.constant dense<0xFF800000> : vector<8xf32>
    %927 = vector.multi_reduction <maximumf>, %926, %cst_278 [1] : vector<8x4xf32> to vector<8xf32>
    %928 = vector.shape_cast %927 : vector<8xf32> to vector<8x1xf32>
    %929 = vector.broadcast %928 : vector<8x1xf32> to vector<8x4xf32>
    %930 = arith.subf %926, %929 : vector<8x4xf32>
    %931 = math.exp %930 : vector<8x4xf32>
    %cst_279 = arith.constant dense<0.000000e+00> : vector<8xf32>
    %932 = vector.multi_reduction <add>, %931, %cst_279 [1] : vector<8x4xf32> to vector<8xf32>
    %933 = vector.shape_cast %932 : vector<8xf32> to vector<8x1xf32>
    %934 = math.log %933 : vector<8x1xf32>
    %935 = vector.broadcast %934 : vector<8x1xf32> to vector<8x4xf32>
    %936 = arith.subf %930, %935 : vector<8x4xf32>
    %c0_280 = arith.constant 0 : index
    %c0_281 = arith.constant 0 : index
    %937 = vector.load %arg5[%c0_280, %c0_281] : memref<8x4xf32, #tpu.memory_space<vmem>>, vector<8x4xf32>
    tpu.vector_store %arg5[%c0_280, %c0_281], %936 {strides = array<i32>} : memref<8x4xf32, #tpu.memory_space<vmem>>, vector<8x4xf32>,
    return
  }
  func.func @transform_0(%arg0: i32, %arg1: memref<8x16xi32, #tpu.memory_space<smem>>) -> (i32, i32) {
    %c0_i32 = arith.constant 0 : i32
    %c0_i32_0 = arith.constant 0 : i32
    %c0_i32_1 = arith.constant 0 : i32
    return %c0_i32, %c0_i32_0 : i32, i32
  }
  func.func @transform_1(%arg0: i32, %arg1: memref<8x16xi32, #tpu.memory_space<smem>>) -> (i32, i32) {
    %c0_i32 = arith.constant 0 : i32
    %c0_i32_0 = arith.constant 0 : i32
    %c0_i32_1 = arith.constant 0 : i32
    return %c0_i32, %c0_i32_0 : i32, i32
  }
  func.func @transform_2(%arg0: i32, %arg1: memref<8x16xi32, #tpu.memory_space<smem>>) -> (i32, i32) {
    %c0_i32 = arith.constant 0 : i32
    %c0_i32_0 = arith.constant 0 : i32
    %c0_i32_1 = arith.constant 0 : i32
    return %c0_i32, %c0_i32_0 : i32, i32
  }
  func.func @transform_3(%arg0: i32, %arg1: memref<8x16xi32, #tpu.memory_space<smem>>) -> (i32, i32) {
    %c0_i32 = arith.constant 0 : i32
    %c0_i32_0 = arith.constant 0 : i32
    return %arg0, %c0_i32 : i32, i32
  }
}

</mosaic_0001>

<llo_original>
// kernel: tpu_custom_call.1
$region0: #{tpu_custom_call.1}
  #allocation0 [shape = 'u32[]', space=smem, size = 0x4, offset = 0x4, fixed_abs, tag = 'smem constant byte address 0x4 - core index']
  #allocation1 [shape = 'u32[144,128]{1,0:T(1,128)}', space=vmem, size = 0x12000, scoped, tag = 'internal scratch']
  #allocation2 [shape = 'f32[8,32]{1,0:T(8,128)}', space=vmem, size = 0x1000, scoped, tag = 'scratch operand']
  #allocation3 [shape = 's32[1]{0}', space=sflag, size = 0x4, scoped, tag = 'scoped memory for tpu_custom_call.1']
  #allocation4 [shape = 'u8[4096]{0}', space=smem, size = 0x1000, scoped, tag = 'prefetched SMEM operand 0']
  %s0 = inlined_call_operand.vmem [shape: s32[8,16], index: 0, kind: input, shape index: {}]
  %s1 = inlined_call_operand.vmem [shape: f32[3072,32], index: 1, kind: input, shape index: {}]
  %s2 = inlined_call_operand.vmem [shape: f32[32,4], index: 2, kind: input, shape index: {}]
  %s3 = inlined_call_operand.vmem [shape: f32[1,4], index: 3, kind: input, shape index: {}]
  %s4 = inlined_call_operand.vmem [shape: f32[8,4], index: 4, kind: output, shape index: {}]
  %s5 = sld [smem:[#allocation0]]
  $region22: #{tpu_custom_call.1} parent=0
    _
  %s7 = ssub.s32 1, %s5
  %s8 = scalar_select 0, %s7, %s5
  %s9 = sshll.u32 %s0, 4
  %s10 = int_to_ptr.vmem [resolvable:$true] %s9
  %12 = dma.vmem_to_smem %s10, 128, [#allocation4], [#allocation3]
  %13 = dma.done [#allocation3], 128
  %14 = sfence
  // Predicated region
  $region2: #{tpu_custom_call.1} parent=0 // pred_check
    _
  $region3: #{tpu_custom_call.1} parent=0 // pred_check_branch
    %16 = sbr.rel (0) target = $region5
  $region4: #{tpu_custom_call.1} parent=0 // pred_region
    _
  $region5: #{tpu_custom_call.1} parent=0 // pred_fallthru
    _
  // Predicated region
  $region6: #{tpu_custom_call.1} parent=0 // pred_check
    _
  $region7: #{tpu_custom_call.1} parent=0 // pred_check_branch
    %18 = sbr.rel (0) target = $region9
  $region8: #{tpu_custom_call.1} parent=0 // pred_region
    _
  $region9: #{tpu_custom_call.1} parent=0 // pred_fallthru
    _
  // Predicated region
  $region10: #{tpu_custom_call.1} parent=0 // pred_check
    _
  $region11: #{tpu_custom_call.1} parent=0 // pred_check_branch
    %20 = sbr.rel (0) target = $region13
  $region12: #{tpu_custom_call.1} parent=0 // pred_region
    _
  $region13: #{tpu_custom_call.1} parent=0 // pred_fallthru
    _
  %s21 = smul.u32 0, 8
  %s22 = smul.u32 %s21, 128
  %s23 = sld [smem:[#allocation4 + %s22]]
  %s24 = scalar_lea.vmem %s1, %s23
  %v25 = vld [vmem:[%s24] sm:$0x1]
  %s26 = sadd.s32 %s22, 1
  %s27 = sld [smem:[#allocation4 + %s26]]
  %s28 = scalar_lea.vmem %s1, %s27
  %v29 = vld [vmem:[%s28] sm:$0x1]
  %v30 = vmax.f32 %v25, %v29
  %s31 = sadd.s32 %s22, 2
  %s32 = sld [smem:[#allocation4 + %s31]]
  %s33 = scalar_lea.vmem %s1, %s32
  %v34 = vld [vmem:[%s33] sm:$0x1]
  %v35 = vmax.f32 %v30, %v34
  %s36 = sadd.s32 %s22, 3
  %s37 = sld [smem:[#allocation4 + %s36]]
  %s38 = scalar_lea.vmem %s1, %s37
  %v39 = vld [vmem:[%s38] sm:$0x1]
  %v40 = vmax.f32 %v35, %v39
  %s41 = sadd.s32 %s22, 4
  %s42 = sld [smem:[#allocation4 + %s41]]
  %s43 = scalar_lea.vmem %s1, %s42
  %v44 = vld [vmem:[%s43] sm:$0x1]
  %v45 = vmax.f32 %v40, %v44
  %s46 = sadd.s32 %s22, 5
  %s47 = sld [smem:[#allocation4 + %s46]]
  %s48 = scalar_lea.vmem %s1, %s47
  %v49 = vld [vmem:[%s48] sm:$0x1]
  %v50 = vmax.f32 %v45, %v49
  %s51 = sadd.s32 %s22, 6
  %s52 = sld [smem:[#allocation4 + %s51]]
  %s53 = scalar_lea.vmem %s1, %s52
  %v54 = vld [vmem:[%s53] sm:$0x1]
  %v55 = vmax.f32 %v50, %v54
  %s56 = sadd.s32 %s22, 7
  %s57 = sld [smem:[#allocation4 + %s56]]
  %s58 = scalar_lea.vmem %s1, %s57
  %v59 = vld [vmem:[%s58] sm:$0x1]
  %v60 = vmax.f32 %v55, %v59
  %s61 = sadd.s32 %s22, 8
  %s62 = sld [smem:[#allocation4 + %s61]]
  %s63 = scalar_lea.vmem %s1, %s62
  %v64 = vld [vmem:[%s63] sm:$0x1]
  %v65 = vmax.f32 %v60, %v64
  %s66 = sadd.s32 %s22, 9
  %s67 = sld [smem:[#allocation4 + %s66]]
  %s68 = scalar_lea.vmem %s1, %s67
  %v69 = vld [vmem:[%s68] sm:$0x1]
  %v70 = vmax.f32 %v65, %v69
  %s71 = sadd.s32 %s22, 10
  %s72 = sld [smem:[#allocation4 + %s71]]
  %s73 = scalar_lea.vmem %s1, %s72
  %v74 = vld [vmem:[%s73] sm:$0x1]
  %v75 = vmax.f32 %v70, %v74
  %s76 = sadd.s32 %s22, 11
  %s77 = sld [smem:[#allocation4 + %s76]]
  %s78 = scalar_lea.vmem %s1, %s77
  %v79 = vld [vmem:[%s78] sm:$0x1]
  %v80 = vmax.f32 %v75, %v79
  %s81 = sadd.s32 %s22, 12
  %s82 = sld [smem:[#allocation4 + %s81]]
  %s83 = scalar_lea.vmem %s1, %s82
  %v84 = vld [vmem:[%s83] sm:$0x1]
  %v85 = vmax.f32 %v80, %v84
  %s86 = sadd.s32 %s22, 13
  %s87 = sld [smem:[#allocation4 + %s86]]
  %s88 = scalar_lea.vmem %s1, %s87
  %v89 = vld [vmem:[%s88] sm:$0x1]
  %v90 = vmax.f32 %v85, %v89
  %s91 = sadd.s32 %s22, 14
  %s92 = sld [smem:[#allocation4 + %s91]]
  %s93 = scalar_lea.vmem %s1, %s92
  %v94 = vld [vmem:[%s93] sm:$0x1]
  %v95 = vmax.f32 %v90, %v94
  %s96 = sadd.s32 %s22, 15
  %s97 = sld [smem:[#allocation4 + %s96]]
  %s98 = scalar_lea.vmem %s1, %s97
  %v99 = vld [vmem:[%s98] sm:$0x1]
  %v100 = vmax.f32 %v95, %v99
  %vm101 = vcmask 253952
  %102 = vst.msk [vmem:[#allocation2] sm:$0x1] %vm101, %v100
  %s103 = sadd.s32 %s21, 1
  %s104 = smul.u32 %s103, 128
  %s105 = sld [smem:[#allocation4 + %s104]]
  %s106 = scalar_lea.vmem %s1, %s105
  %v107 = vld [vmem:[%s106] sm:$0x1]
  %s108 = sadd.s32 %s104, 1
  %s109 = sld [smem:[#allocation4 + %s108]]
  %s110 = scalar_lea.vmem %s1, %s109
  %v111 = vld [vmem:[%s110] sm:$0x1]
  %v112 = vmax.f32 %v107, %v111
  %s113 = sadd.s32 %s104, 2
  %s114 = sld [smem:[#allocation4 + %s113]]
  %s115 = scalar_lea.vmem %s1, %s114
  %v116 = vld [vmem:[%s115] sm:$0x1]
  %v117 = vmax.f32 %v112, %v116
  %s118 = sadd.s32 %s104, 3
  %s119 = sld [smem:[#allocation4 + %s118]]
  %s120 = scalar_lea.vmem %s1, %s119
  %v121 = vld [vmem:[%s120] sm:$0x1]
  %v122 = vmax.f32 %v117, %v121
  %s123 = sadd.s32 %s104, 4
  %s124 = sld [smem:[#allocation4 + %s123]]
  %s125 = scalar_lea.vmem %s1, %s124
  %v126 = vld [vmem:[%s125] sm:$0x1]
  %v127 = vmax.f32 %v122, %v126
  %s128 = sadd.s32 %s104, 5
  %s129 = sld [smem:[#allocation4 + %s128]]
  %s130 = scalar_lea.vmem %s1, %s129
  %v131 = vld [vmem:[%s130] sm:$0x1]
  %v132 = vmax.f32 %v127, %v131
  %s133 = sadd.s32 %s104, 6
  %s134 = sld [smem:[#allocation4 + %s133]]
  %s135 = scalar_lea.vmem %s1, %s134
  %v136 = vld [vmem:[%s135] sm:$0x1]
  %v137 = vmax.f32 %v132, %v136
  %s138 = sadd.s32 %s104, 7
  %s139 = sld [smem:[#allocation4 + %s138]]
  %s140 = scalar_lea.vmem %s1, %s139
  %v141 = vld [vmem:[%s140] sm:$0x1]
  %v142 = vmax.f32 %v137, %v141
  %s143 = sadd.s32 %s104, 8
  %s144 = sld [smem:[#allocation4 + %s143]]
  %s145 = scalar_lea.vmem %s1, %s144
  %v146 = vld [vmem:[%s145] sm:$0x1]
  %v147 = vmax.f32 %v142, %v146
  %s148 = sadd.s32 %s104, 9
  %s149 = sld [smem:[#allocation4 + %s148]]
  %s150 = scalar_lea.vmem %s1, %s149
  %v151 = vld [vmem:[%s150] sm:$0x1]
  %v152 = vmax.f32 %v147, %v151
  %s153 = sadd.s32 %s104, 10
  %s154 = sld [smem:[#allocation4 + %s153]]
  %s155 = scalar_lea.vmem %s1, %s154
  %v156 = vld [vmem:[%s155] sm:$0x1]
  %v157 = vmax.f32 %v152, %v156
  %s158 = sadd.s32 %s104, 11
  %s159 = sld [smem:[#allocation4 + %s158]]
  %s160 = scalar_lea.vmem %s1, %s159
  %v161 = vld [vmem:[%s160] sm:$0x1]
  %v162 = vmax.f32 %v157, %v161
  %s163 = sadd.s32 %s104, 12
  %s164 = sld [smem:[#allocation4 + %s163]]
  %s165 = scalar_lea.vmem %s1, %s164
  %v166 = vld [vmem:[%s165] sm:$0x1]
  %v167 = vmax.f32 %v162, %v166
  %s168 = sadd.s32 %s104, 13
  %s169 = sld [smem:[#allocation4 + %s168]]
  %s170 = scalar_lea.vmem %s1, %s169
  %v171 = vld [vmem:[%s170] sm:$0x1]
  %v172 = vmax.f32 %v167, %v171
  %s173 = sadd.s32 %s104, 14
  %s174 = sld [smem:[#allocation4 + %s173]]
  %s175 = scalar_lea.vmem %s1, %s174
  %v176 = vld [vmem:[%s175] sm:$0x1]
  %v177 = vmax.f32 %v172, %v176
  %s178 = sadd.s32 %s104, 15
  %s179 = sld [smem:[#allocation4 + %s178]]
  %s180 = scalar_lea.vmem %s1, %s179
  %v181 = vld [vmem:[%s180] sm:$0x1]
  %v182 = vmax.f32 %v177, %v181
  %183 = vst.msk [vmem:[#allocation2 + $0x1] sm:$0x1] %vm101, %v182
  %s184 = sadd.s32 %s21, 2
  %s185 = smul.u32 %s184, 128
  %s186 = sld [smem:[#allocation4 + %s185]]
  %s187 = scalar_lea.vmem %s1, %s186
  %v188 = vld [vmem:[%s187] sm:$0x1]
  %s189 = sadd.s32 %s185, 1
  %s190 = sld [smem:[#allocation4 + %s189]]
  %s191 = scalar_lea.vmem %s1, %s190
  %v192 = vld [vmem:[%s191] sm:$0x1]
  %v193 = vmax.f32 %v188, %v192
  %s194 = sadd.s32 %s185, 2
  %s195 = sld [smem:[#allocation4 + %s194]]
  %s196 = scalar_lea.vmem %s1, %s195
  %v197 = vld [vmem:[%s196] sm:$0x1]
  %v198 = vmax.f32 %v193, %v197
  %s199 = sadd.s32 %s185, 3
  %s200 = sld [smem:[#allocation4 + %s199]]
  %s201 = scalar_lea.vmem %s1, %s200
  %v202 = vld [vmem:[%s201] sm:$0x1]
  %v203 = vmax.f32 %v198, %v202
  %s204 = sadd.s32 %s185, 4
  %s205 = sld [smem:[#allocation4 + %s204]]
  %s206 = scalar_lea.vmem %s1, %s205
  %v207 = vld [vmem:[%s206] sm:$0x1]
  %v208 = vmax.f32 %v203, %v207
  %s209 = sadd.s32 %s185, 5
  %s210 = sld [smem:[#allocation4 + %s209]]
  %s211 = scalar_lea.vmem %s1, %s210
  %v212 = vld [vmem:[%s211] sm:$0x1]
  %v213 = vmax.f32 %v208, %v212
  %s214 = sadd.s32 %s185, 6
  %s215 = sld [smem:[#allocation4 + %s214]]
  %s216 = scalar_lea.vmem %s1, %s215
  %v217 = vld [vmem:[%s216] sm:$0x1]
  %v218 = vmax.f32 %v213, %v217
  %s219 = sadd.s32 %s185, 7
  %s220 = sld [smem:[#allocation4 + %s219]]
  %s221 = scalar_lea.vmem %s1, %s220
  %v222 = vld [vmem:[%s221] sm:$0x1]
  %v223 = vmax.f32 %v218, %v222
  %s224 = sadd.s32 %s185, 8
  %s225 = sld [smem:[#allocation4 + %s224]]
  %s226 = scalar_lea.vmem %s1, %s225
  %v227 = vld [vmem:[%s226] sm:$0x1]
  %v228 = vmax.f32 %v223, %v227
  %s229 = sadd.s32 %s185, 9
  %s230 = sld [smem:[#allocation4 + %s229]]
  %s231 = scalar_lea.vmem %s1, %s230
  %v232 = vld [vmem:[%s231] sm:$0x1]
  %v233 = vmax.f32 %v228, %v232
  %s234 = sadd.s32 %s185, 10
  %s235 = sld [smem:[#allocation4 + %s234]]
  %s236 = scalar_lea.vmem %s1, %s235
  %v237 = vld [vmem:[%s236] sm:$0x1]
  %v238 = vmax.f32 %v233, %v237
  %s239 = sadd.s32 %s185, 11
  %s240 = sld [smem:[#allocation4 + %s239]]
  %s241 = scalar_lea.vmem %s1, %s240
  %v242 = vld [vmem:[%s241] sm:$0x1]
  %v243 = vmax.f32 %v238, %v242
  %s244 = sadd.s32 %s185, 12
  %s245 = sld [smem:[#allocation4 + %s244]]
  %s246 = scalar_lea.vmem %s1, %s245
  %v247 = vld [vmem:[%s246] sm:$0x1]
  %v248 = vmax.f32 %v243, %v247
  %s249 = sadd.s32 %s185, 13
  %s250 = sld [smem:[#allocation4 + %s249]]
  %s251 = scalar_lea.vmem %s1, %s250
  %v252 = vld [vmem:[%s251] sm:$0x1]
  %v253 = vmax.f32 %v248, %v252
  %s254 = sadd.s32 %s185, 14
  %s255 = sld [smem:[#allocation4 + %s254]]
  %s256 = scalar_lea.vmem %s1, %s255
  %v257 = vld [vmem:[%s256] sm:$0x1]
  %v258 = vmax.f32 %v253, %v257
  %s259 = sadd.s32 %s185, 15
  %s260 = sld [smem:[#allocation4 + %s259]]
  %s261 = scalar_lea.vmem %s1, %s260
  %v262 = vld [vmem:[%s261] sm:$0x1]
  %v263 = vmax.f32 %v258, %v262
  %264 = vst.msk [vmem:[#allocation2 + $0x2] sm:$0x1] %vm101, %v263
  %s265 = sadd.s32 %s21, 3
  %s266 = smul.u32 %s265, 128
  %s267 = sld [smem:[#allocation4 + %s266]]
  %s268 = scalar_lea.vmem %s1, %s267
  %v269 = vld [vmem:[%s268] sm:$0x1]
  %s270 = sadd.s32 %s266, 1
  %s271 = sld [smem:[#allocation4 + %s270]]
  %s272 = scalar_lea.vmem %s1, %s271
  %v273 = vld [vmem:[%s272] sm:$0x1]
  %v274 = vmax.f32 %v269, %v273
  %s275 = sadd.s32 %s266, 2
  %s276 = sld [smem:[#allocation4 + %s275]]
  %s277 = scalar_lea.vmem %s1, %s276
  %v278 = vld [vmem:[%s277] sm:$0x1]
  %v279 = vmax.f32 %v274, %v278
  %s280 = sadd.s32 %s266, 3
  %s281 = sld [smem:[#allocation4 + %s280]]
  %s282 = scalar_lea.vmem %s1, %s281
  %v283 = vld [vmem:[%s282] sm:$0x1]
  %v284 = vmax.f32 %v279, %v283
  %s285 = sadd.s32 %s266, 4
  %s286 = sld [smem:[#allocation4 + %s285]]
  %s287 = scalar_lea.vmem %s1, %s286
  %v288 = vld [vmem:[%s287] sm:$0x1]
  %v289 = vmax.f32 %v284, %v288
  %s290 = sadd.s32 %s266, 5
  %s291 = sld [smem:[#allocation4 + %s290]]
  %s292 = scalar_lea.vmem %s1, %s291
  %v293 = vld [vmem:[%s292] sm:$0x1]
  %v294 = vmax.f32 %v289, %v293
  %s295 = sadd.s32 %s266, 6
  %s296 = sld [smem:[#allocation4 + %s295]]
  %s297 = scalar_lea.vmem %s1, %s296
  %v298 = vld [vmem:[%s297] sm:$0x1]
  %v299 = vmax.f32 %v294, %v298
  %s300 = sadd.s32 %s266, 7
  %s301 = sld [smem:[#allocation4 + %s300]]
  %s302 = scalar_lea.vmem %s1, %s301
  %v303 = vld [vmem:[%s302] sm:$0x1]
  %v304 = vmax.f32 %v299, %v303
  %s305 = sadd.s32 %s266, 8
  %s306 = sld [smem:[#allocation4 + %s305]]
  %s307 = scalar_lea.vmem %s1, %s306
  %v308 = vld [vmem:[%s307] sm:$0x1]
  %v309 = vmax.f32 %v304, %v308
  %s310 = sadd.s32 %s266, 9
  %s311 = sld [smem:[#allocation4 + %s310]]
  %s312 = scalar_lea.vmem %s1, %s311
  %v313 = vld [vmem:[%s312] sm:$0x1]
  %v314 = vmax.f32 %v309, %v313
  %s315 = sadd.s32 %s266, 10
  %s316 = sld [smem:[#allocation4 + %s315]]
  %s317 = scalar_lea.vmem %s1, %s316
  %v318 = vld [vmem:[%s317] sm:$0x1]
  %v319 = vmax.f32 %v314, %v318
  %s320 = sadd.s32 %s266, 11
  %s321 = sld [smem:[#allocation4 + %s320]]
  %s322 = scalar_lea.vmem %s1, %s321
  %v323 = vld [vmem:[%s322] sm:$0x1]
  %v324 = vmax.f32 %v319, %v323
  %s325 = sadd.s32 %s266, 12
  %s326 = sld [smem:[#allocation4 + %s325]]
  %s327 = scalar_lea.vmem %s1, %s326
  %v328 = vld [vmem:[%s327] sm:$0x1]
  %v329 = vmax.f32 %v324, %v328
  %s330 = sadd.s32 %s266, 13
  %s331 = sld [smem:[#allocation4 + %s330]]
  %s332 = scalar_lea.vmem %s1, %s331
  %v333 = vld [vmem:[%s332] sm:$0x1]
  %v334 = vmax.f32 %v329, %v333
  %s335 = sadd.s32 %s266, 14
  %s336 = sld [smem:[#allocation4 + %s335]]
  %s337 = scalar_lea.vmem %s1, %s336
  %v338 = vld [vmem:[%s337] sm:$0x1]
  %v339 = vmax.f32 %v334, %v338
  %s340 = sadd.s32 %s266, 15
  %s341 = sld [smem:[#allocation4 + %s340]]
  %s342 = scalar_lea.vmem %s1, %s341
  %v343 = vld [vmem:[%s342] sm:$0x1]
  %v344 = vmax.f32 %v339, %v343
  %345 = vst.msk [vmem:[#allocation2 + $0x3] sm:$0x1] %vm101, %v344
  %s346 = sadd.s32 %s21, 4
  %s347 = smul.u32 %s346, 128
  %s348 = sld [smem:[#allocation4 + %s347]]
  %s349 = scalar_lea.vmem %s1, %s348
  %v350 = vld [vmem:[%s349] sm:$0x1]
  %s351 = sadd.s32 %s347, 1
  %s352 = sld [smem:[#allocation4 + %s351]]
  %s353 = scalar_lea.vmem %s1, %s352
  %v354 = vld [vmem:[%s353] sm:$0x1]
  %v355 = vmax.f32 %v350, %v354
  %s356 = sadd.s32 %s347, 2
  %s357 = sld [smem:[#allocation4 + %s356]]
  %s358 = scalar_lea.vmem %s1, %s357
  %v359 = vld [vmem:[%s358] sm:$0x1]
  %v360 = vmax.f32 %v355, %v359
  %s361 = sadd.s32 %s347, 3
  %s362 = sld [smem:[#allocation4 + %s361]]
  %s363 = scalar_lea.vmem %s1, %s362
  %v364 = vld [vmem:[%s363] sm:$0x1]
  %v365 = vmax.f32 %v360, %v364
  %s366 = sadd.s32 %s347, 4
  %s367 = sld [smem:[#allocation4 + %s366]]
  %s368 = scalar_lea.vmem %s1, %s367
  %v369 = vld [vmem:[%s368] sm:$0x1]
  %v370 = vmax.f32 %v365, %v369
  %s371 = sadd.s32 %s347, 5
  %s372 = sld [smem:[#allocation4 + %s371]]
  %s373 = scalar_lea.vmem %s1, %s372
  %v374 = vld [vmem:[%s373] sm:$0x1]
  %v375 = vmax.f32 %v370, %v374
  %s376 = sadd.s32 %s347, 6
  %s377 = sld [smem:[#allocation4 + %s376]]
  %s378 = scalar_lea.vmem %s1, %s377
  %v379 = vld [vmem:[%s378] sm:$0x1]
  %v380 = vmax.f32 %v375, %v379
  %s381 = sadd.s32 %s347, 7
  %s382 = sld [smem:[#allocation4 + %s381]]
  %s383 = scalar_lea.vmem %s1, %s382
  %v384 = vld [vmem:[%s383] sm:$0x1]
  %v385 = vmax.f32 %v380, %v384
  %s386 = sadd.s32 %s347, 8
  %s387 = sld [smem:[#allocation4 + %s386]]
  %s388 = scalar_lea.vmem %s1, %s387
  %v389 = vld [vmem:[%s388] sm:$0x1]
  %v390 = vmax.f32 %v385, %v389
  %s391 = sadd.s32 %s347, 9
  %s392 = sld [smem:[#allocation4 + %s391]]
  %s393 = scalar_lea.vmem %s1, %s392
  %v394 = vld [vmem:[%s393] sm:$0x1]
  %v395 = vmax.f32 %v390, %v394
  %s396 = sadd.s32 %s347, 10
  %s397 = sld [smem:[#allocation4 + %s396]]
  %s398 = scalar_lea.vmem %s1, %s397
  %v399 = vld [vmem:[%s398] sm:$0x1]
  %v400 = vmax.f32 %v395, %v399
  %s401 = sadd.s32 %s347, 11
  %s402 = sld [smem:[#allocation4 + %s401]]
  %s403 = scalar_lea.vmem %s1, %s402
  %v404 = vld [vmem:[%s403] sm:$0x1]
  %v405 = vmax.f32 %v400, %v404
  %s406 = sadd.s32 %s347, 12
  %s407 = sld [smem:[#allocation4 + %s406]]
  %s408 = scalar_lea.vmem %s1, %s407
  %v409 = vld [vmem:[%s408] sm:$0x1]
  %v410 = vmax.f32 %v405, %v409
  %s411 = sadd.s32 %s347, 13
  %s412 = sld [smem:[#allocation4 + %s411]]
  %s413 = scalar_lea.vmem %s1, %s412
  %v414 = vld [vmem:[%s413] sm:$0x1]
  %v415 = vmax.f32 %v410, %v414
  %s416 = sadd.s32 %s347, 14
  %s417 = sld [smem:[#allocation4 + %s416]]
  %s418 = scalar_lea.vmem %s1, %s417
  %v419 = vld [vmem:[%s418] sm:$0x1]
  %v420 = vmax.f32 %v415, %v419
  %s421 = sadd.s32 %s347, 15
  %s422 = sld [smem:[#allocation4 + %s421]]
  %s423 = scalar_lea.vmem %s1, %s422
  %v424 = vld [vmem:[%s423] sm:$0x1]
  %v425 = vmax.f32 %v420, %v424
  %426 = vst.msk [vmem:[#allocation2 + $0x4] sm:$0x1] %vm101, %v425
  %s427 = sadd.s32 %s21, 5
  %s428 = smul.u32 %s427, 128
  %s429 = sld [smem:[#allocation4 + %s428]]
  %s430 = scalar_lea.vmem %s1, %s429
  %v431 = vld [vmem:[%s430] sm:$0x1]
  %s432 = sadd.s32 %s428, 1
  %s433 = sld [smem:[#allocation4 + %s432]]
  %s434 = scalar_lea.vmem %s1, %s433
  %v435 = vld [vmem:[%s434] sm:$0x1]
  %v436 = vmax.f32 %v431, %v435
  %s437 = sadd.s32 %s428, 2
  %s438 = sld [smem:[#allocation4 + %s437]]
  %s439 = scalar_lea.vmem %s1, %s438
  %v440 = vld [vmem:[%s439] sm:$0x1]
  %v441 = vmax.f32 %v436, %v440
  %s442 = sadd.s32 %s428, 3
  %s443 = sld [smem:[#allocation4 + %s442]]
  %s444 = scalar_lea.vmem %s1, %s443
  %v445 = vld [vmem:[%s444] sm:$0x1]
  %v446 = vmax.f32 %v441, %v445
  %s447 = sadd.s32 %s428, 4
  %s448 = sld [smem:[#allocation4 + %s447]]
  %s449 = scalar_lea.vmem %s1, %s448
  %v450 = vld [vmem:[%s449] sm:$0x1]
  %v451 = vmax.f32 %v446, %v450
  %s452 = sadd.s32 %s428, 5
  %s453 = sld [smem:[#allocation4 + %s452]]
  %s454 = scalar_lea.vmem %s1, %s453
  %v455 = vld [vmem:[%s454] sm:$0x1]
  %v456 = vmax.f32 %v451, %v455
  %s457 = sadd.s32 %s428, 6
  %s458 = sld [smem:[#allocation4 + %s457]]
  %s459 = scalar_lea.vmem %s1, %s458
  %v460 = vld [vmem:[%s459] sm:$0x1]
  %v461 = vmax.f32 %v456, %v460
  %s462 = sadd.s32 %s428, 7
  %s463 = sld [smem:[#allocation4 + %s462]]
  %s464 = scalar_lea.vmem %s1, %s463
  %v465 = vld [vmem:[%s464] sm:$0x1]
  %v466 = vmax.f32 %v461, %v465
  %s467 = sadd.s32 %s428, 8
  %s468 = sld [smem:[#allocation4 + %s467]]
  %s469 = scalar_lea.vmem %s1, %s468
  %v470 = vld [vmem:[%s469] sm:$0x1]
  %v471 = vmax.f32 %v466, %v470
  %s472 = sadd.s32 %s428, 9
  %s473 = sld [smem:[#allocation4 + %s472]]
  %s474 = scalar_lea.vmem %s1, %s473
  %v475 = vld [vmem:[%s474] sm:$0x1]
  %v476 = vmax.f32 %v471, %v475
  %s477 = sadd.s32 %s428, 10
  %s478 = sld [smem:[#allocation4 + %s477]]
  %s479 = scalar_lea.vmem %s1, %s478
  %v480 = vld [vmem:[%s479] sm:$0x1]
  %v481 = vmax.f32 %v476, %v480
  %s482 = sadd.s32 %s428, 11
  %s483 = sld [smem:[#allocation4 + %s482]]
  %s484 = scalar_lea.vmem %s1, %s483
  %v485 = vld [vmem:[%s484] sm:$0x1]
  %v486 = vmax.f32 %v481, %v485
  %s487 = sadd.s32 %s428, 12
  %s488 = sld [smem:[#allocation4 + %s487]]
  %s489 = scalar_lea.vmem %s1, %s488
  %v490 = vld [vmem:[%s489] sm:$0x1]
  %v491 = vmax.f32 %v486, %v490
  %s492 = sadd.s32 %s428, 13
  %s493 = sld [smem:[#allocation4 + %s492]]
  %s494 = scalar_lea.vmem %s1, %s493
  %v495 = vld [vmem:[%s494] sm:$0x1]
  %v496 = vmax.f32 %v491, %v495
  %s497 = sadd.s32 %s428, 14
  %s498 = sld [smem:[#allocation4 + %s497]]
  %s499 = scalar_lea.vmem %s1, %s498
  %v500 = vld [vmem:[%s499] sm:$0x1]
  %v501 = vmax.f32 %v496, %v500
  %s502 = sadd.s32 %s428, 15
  %s503 = sld [smem:[#allocation4 + %s502]]
  %s504 = scalar_lea.vmem %s1, %s503
  %v505 = vld [vmem:[%s504] sm:$0x1]
  %v506 = vmax.f32 %v501, %v505
  %507 = vst.msk [vmem:[#allocation2 + $0x5] sm:$0x1] %vm101, %v506
  %s508 = sadd.s32 %s21, 6
  %s509 = smul.u32 %s508, 128
  %s510 = sld [smem:[#allocation4 + %s509]]
  %s511 = scalar_lea.vmem %s1, %s510
  %v512 = vld [vmem:[%s511] sm:$0x1]
  %s513 = sadd.s32 %s509, 1
  %s514 = sld [smem:[#allocation4 + %s513]]
  %s515 = scalar_lea.vmem %s1, %s514
  %v516 = vld [vmem:[%s515] sm:$0x1]
  %v517 = vmax.f32 %v512, %v516
  %s518 = sadd.s32 %s509, 2
  %s519 = sld [smem:[#allocation4 + %s518]]
  %s520 = scalar_lea.vmem %s1, %s519
  %v521 = vld [vmem:[%s520] sm:$0x1]
  %v522 = vmax.f32 %v517, %v521
  %s523 = sadd.s32 %s509, 3
  %s524 = sld [smem:[#allocation4 + %s523]]
  %s525 = scalar_lea.vmem %s1, %s524
  %v526 = vld [vmem:[%s525] sm:$0x1]
  %v527 = vmax.f32 %v522, %v526
  %s528 = sadd.s32 %s509, 4
  %s529 = sld [smem:[#allocation4 + %s528]]
  %s530 = scalar_lea.vmem %s1, %s529
  %v531 = vld [vmem:[%s530] sm:$0x1]
  %v532 = vmax.f32 %v527, %v531
  %s533 = sadd.s32 %s509, 5
  %s534 = sld [smem:[#allocation4 + %s533]]
  %s535 = scalar_lea.vmem %s1, %s534
  %v536 = vld [vmem:[%s535] sm:$0x1]
  %v537 = vmax.f32 %v532, %v536
  %s538 = sadd.s32 %s509, 6
  %s539 = sld [smem:[#allocation4 + %s538]]
  %s540 = scalar_lea.vmem %s1, %s539
  %v541 = vld [vmem:[%s540] sm:$0x1]
  %v542 = vmax.f32 %v537, %v541
  %s543 = sadd.s32 %s509, 7
  %s544 = sld [smem:[#allocation4 + %s543]]
  %s545 = scalar_lea.vmem %s1, %s544
  %v546 = vld [vmem:[%s545] sm:$0x1]
  %v547 = vmax.f32 %v542, %v546
  %s548 = sadd.s32 %s509, 8
  %s549 = sld [smem:[#allocation4 + %s548]]
  %s550 = scalar_lea.vmem %s1, %s549
  %v551 = vld [vmem:[%s550] sm:$0x1]
  %v552 = vmax.f32 %v547, %v551
  %s553 = sadd.s32 %s509, 9
  %s554 = sld [smem:[#allocation4 + %s553]]
  %s555 = scalar_lea.vmem %s1, %s554
  %v556 = vld [vmem:[%s555] sm:$0x1]
  %v557 = vmax.f32 %v552, %v556
  %s558 = sadd.s32 %s509, 10
  %s559 = sld [smem:[#allocation4 + %s558]]
  %s560 = scalar_lea.vmem %s1, %s559
  %v561 = vld [vmem:[%s560] sm:$0x1]
  %v562 = vmax.f32 %v557, %v561
  %s563 = sadd.s32 %s509, 11
  %s564 = sld [smem:[#allocation4 + %s563]]
  %s565 = scalar_lea.vmem %s1, %s564
  %v566 = vld [vmem:[%s565] sm:$0x1]
  %v567 = vmax.f32 %v562, %v566
  %s568 = sadd.s32 %s509, 12
  %s569 = sld [smem:[#allocation4 + %s568]]
  %s570 = scalar_lea.vmem %s1, %s569
  %v571 = vld [vmem:[%s570] sm:$0x1]
  %v572 = vmax.f32 %v567, %v571
  %s573 = sadd.s32 %s509, 13
  %s574 = sld [smem:[#allocation4 + %s573]]
  %s575 = scalar_lea.vmem %s1, %s574
  %v576 = vld [vmem:[%s575] sm:$0x1]
  %v577 = vmax.f32 %v572, %v576
  %s578 = sadd.s32 %s509, 14
  %s579 = sld [smem:[#allocation4 + %s578]]
  %s580 = scalar_lea.vmem %s1, %s579
  %v581 = vld [vmem:[%s580] sm:$0x1]
  %v582 = vmax.f32 %v577, %v581
  %s583 = sadd.s32 %s509, 15
  %s584 = sld [smem:[#allocation4 + %s583]]
  %s585 = scalar_lea.vmem %s1, %s584
  %v586 = vld [vmem:[%s585] sm:$0x1]
  %v587 = vmax.f32 %v582, %v586
  %588 = vst.msk [vmem:[#allocation2 + $0x6] sm:$0x1] %vm101, %v587
  %s589 = sadd.s32 %s21, 7
  %s590 = smul.u32 %s589, 128
  %s591 = sld [smem:[#allocation4 + %s590]]
  %s592 = scalar_lea.vmem %s1, %s591
  %v593 = vld [vmem:[%s592] sm:$0x1]
  %s594 = sadd.s32 %s590, 1
  %s595 = sld [smem:[#allocation4 + %s594]]
  %s596 = scalar_lea.vmem %s1, %s595
  %v597 = vld [vmem:[%s596] sm:$0x1]
  %v598 = vmax.f32 %v593, %v597
  %s599 = sadd.s32 %s590, 2
  %s600 = sld [smem:[#allocation4 + %s599]]
  %s601 = scalar_lea.vmem %s1, %s600
  %v602 = vld [vmem:[%s601] sm:$0x1]
  %v603 = vmax.f32 %v598, %v602
  %s604 = sadd.s32 %s590, 3
  %s605 = sld [smem:[#allocation4 + %s604]]
  %s606 = scalar_lea.vmem %s1, %s605
  %v607 = vld [vmem:[%s606] sm:$0x1]
  %v608 = vmax.f32 %v603, %v607
  %s609 = sadd.s32 %s590, 4
  %s610 = sld [smem:[#allocation4 + %s609]]
  %s611 = scalar_lea.vmem %s1, %s610
  %v612 = vld [vmem:[%s611] sm:$0x1]
  %v613 = vmax.f32 %v608, %v612
  %s614 = sadd.s32 %s590, 5
  %s615 = sld [smem:[#allocation4 + %s614]]
  %s616 = scalar_lea.vmem %s1, %s615
  %v617 = vld [vmem:[%s616] sm:$0x1]
  %v618 = vmax.f32 %v613, %v617
  %s619 = sadd.s32 %s590, 6
  %s620 = sld [smem:[#allocation4 + %s619]]
  %s621 = scalar_lea.vmem %s1, %s620
  %v622 = vld [vmem:[%s621] sm:$0x1]
  %v623 = vmax.f32 %v618, %v622
  %s624 = sadd.s32 %s590, 7
  %s625 = sld [smem:[#allocation4 + %s624]]
  %s626 = scalar_lea.vmem %s1, %s625
  %v627 = vld [vmem:[%s626] sm:$0x1]
  %v628 = vmax.f32 %v623, %v627
  %s629 = sadd.s32 %s590, 8
  %s630 = sld [smem:[#allocation4 + %s629]]
  %s631 = scalar_lea.vmem %s1, %s630
  %v632 = vld [vmem:[%s631] sm:$0x1]
  %v633 = vmax.f32 %v628, %v632
  %s634 = sadd.s32 %s590, 9
  %s635 = sld [smem:[#allocation4 + %s634]]
  %s636 = scalar_lea.vmem %s1, %s635
  %v637 = vld [vmem:[%s636] sm:$0x1]
  %v638 = vmax.f32 %v633, %v637
  %s639 = sadd.s32 %s590, 10
  %s640 = sld [smem:[#allocation4 + %s639]]
  %s641 = scalar_lea.vmem %s1, %s640
  %v642 = vld [vmem:[%s641] sm:$0x1]
  %v643 = vmax.f32 %v638, %v642
  %s644 = sadd.s32 %s590, 11
  %s645 = sld [smem:[#allocation4 + %s644]]
  %s646 = scalar_lea.vmem %s1, %s645
  %v647 = vld [vmem:[%s646] sm:$0x1]
  %v648 = vmax.f32 %v643, %v647
  %s649 = sadd.s32 %s590, 12
  %s650 = sld [smem:[#allocation4 + %s649]]
  %s651 = scalar_lea.vmem %s1, %s650
  %v652 = vld [vmem:[%s651] sm:$0x1]
  %v653 = vmax.f32 %v648, %v652
  %s654 = sadd.s32 %s590, 13
  %s655 = sld [smem:[#allocation4 + %s654]]
  %s656 = scalar_lea.vmem %s1, %s655
  %v657 = vld [vmem:[%s656] sm:$0x1]
  %v658 = vmax.f32 %v653, %v657
  %s659 = sadd.s32 %s590, 14
  %s660 = sld [smem:[#allocation4 + %s659]]
  %s661 = scalar_lea.vmem %s1, %s660
  %v662 = vld [vmem:[%s661] sm:$0x1]
  %v663 = vmax.f32 %v658, %v662
  %s664 = sadd.s32 %s590, 15
  %s665 = sld [smem:[#allocation4 + %s664]]
  %s666 = scalar_lea.vmem %s1, %s665
  %v667 = vld [vmem:[%s666] sm:$0x1]
  %v668 = vmax.f32 %v663, %v667
  %669 = vst.msk [vmem:[#allocation2 + $0x7] sm:$0x1] %vm101, %v668
  %v670 = vld [vmem:[#allocation2] sm:$0xff]
  %v671 = vld [vmem:[%s2] sm:$0xff]
  %v672 = vld [vmem:[%s2 + $0x8] sm:$0xff]
  %v673 = vld [vmem:[%s2 + $0x10] sm:$0xff]
  %v674 = vld [vmem:[%s2 + $0x18] sm:$0xff]
  %v675 = vld [vmem:[%s3] sm:$0x1]
  %v677 = vlaneseq
  %v678 = vshrl.u32 %v677, 7
  %v679 = vsub.s32 0, %v678
  %v680 = vrot.slane %v675, %v679
  %vm682 = vcmask 261120
  %v684 = vsel %vm682, %v670, 0
  %686 = vmatprep.subr.mxu0 0.0
  %687 = vmatpush1.msra.mxu0 %v671
  %688 = vmatprep.subr.mxu0 0.0
  %689 = vmatpush1.msra.mxu0 %v672
  %690 = vmatprep.subr.mxu0 0.0
  %691 = vmatpush1.msra.mxu0 %v673
  %692 = vmatprep.subr.mxu0 0.0
  %693 = vmatpush1.msra.mxu0 %v674
  %694 = vmatprep.subr.mxu0 0.0
  %695 = vmatpush1.msra.mxu0 0.0
  %696 = vmatprep.subr.mxu0 0.0
  %697 = vmatpush1.msra.mxu0 0.0
  %698 = vmatprep.subr.mxu0 0.0
  %699 = vmatpush1.msra.mxu0 0.0
  %700 = vmatprep.subr.mxu0 0.0
  %701 = vmatpush1.msra.mxu0 0.0
  %702 = vmatprep.subr.mxu0 0.0
  %703 = vmatpush1.msra.mxu0 0.0
  %704 = vmatprep.subr.mxu0 0.0
  %705 = vmatpush1.msra.mxu0 0.0
  %706 = vmatprep.subr.mxu0 0.0
  %707 = vmatpush1.msra.mxu0 0.0
  %708 = vmatprep.subr.mxu0 0.0
  %709 = vmatpush1.msra.mxu0 0.0
  %710 = vmatprep.subr.mxu0 0.0
  %711 = vmatpush1.msra.mxu0 0.0
  %712 = vmatprep.subr.mxu0 0.0
  %713 = vmatpush1.msra.mxu0 0.0
  %714 = vmatprep.subr.mxu0 0.0
  %715 = vmatpush1.msra.mxu0 0.0
  %716 = vmatprep.subr.mxu0 0.0
  %717 = vmatpush1.msra.mxu0 0.0
  %718 = vmatprep.subr.mxu0 0.0
  %719 = vmatpush1.msra.mxu0 0.0
  %720 = vmatprep.subr.mxu0 0.0
  %721 = vmatpush1.msra.mxu0 0.0
  %722 = vmatprep.subr.mxu0 0.0
  %723 = vmatpush1.msra.mxu0 0.0
  %724 = vmatprep.subr.mxu0 0.0
  %725 = vmatpush1.msra.mxu0 0.0
  %726 = vmatprep.subr.mxu0 0.0
  %727 = vmatpush1.msra.mxu0 0.0
  %728 = vmatprep.subr.mxu0 0.0
  %729 = vmatpush1.msra.mxu0 0.0
  %730 = vmatprep.subr.mxu0 0.0
  %731 = vmatpush1.msra.mxu0 0.0
  %732 = vmatprep.subr.mxu0 0.0
  %733 = vmatpush1.msra.mxu0 0.0
  %734 = vmatprep.subr.mxu0 0.0
  %735 = vmatpush1.msra.mxu0 0.0
  %736 = vmatprep.subr.mxu0 0.0
  %737 = vmatpush1.msra.mxu0 0.0
  %738 = vmatprep.subr.mxu0 0.0
  %739 = vmatpush1.msra.mxu0 0.0
  %740 = vmatprep.subr.mxu0 0.0
  %741 = vmatpush1.msra.mxu0 0.0
  %742 = vmatprep.subr.mxu0 0.0
  %743 = vmatpush1.msra.mxu0 0.0
  %744 = vmatprep.subr.mxu0 0.0
  %745 = vmatpush1.msra.mxu0 0.0
  %746 = vmatprep.subr.mxu0 0.0
  %747 = vmatpush1.msra.mxu0 0.0
  %748 = vmatprep.subr.mxu0 0.0
  %749 = vmatpush1.msra.mxu0 0.0
  %750 = vmatprep.mubr.f32.mxu0 0.0
  %751 = vmatmul.mubr.f32.gmra.mrb[0].mxu0 %v684
  %v752 = vpop.f32.mrb[0].mxu0
  %v753 = vadd.f32 %v680, %v752
  %v754 = vpop.f32.mrb[0].mxu0
  %755 = vdwg.mxu0
  %vm756 = vcmask 31744
  %v757 = vsel %vm756, %v753, -inf
  %758 = vmax.xlane.f32.xlu0 %v757
  %v759 = vpop.xlane.xlu0 %758
  %v760 = vsub.f32 %v753, %v759
  %v761 = vmul.f32 %v760, 1.442695
  %v762 = vpow.pop %v761
  %v763 = vsel %vm756, %v762, 0.0
  %764 = vadd.xlane.f32.xlu0 %v763
  %v765 = vpop.xlane.xlu0 %764
  %v766 = vlog2.pop %v765
  %v767 = vmul.f32 %v766, 0.6931472
  %v768 = vsub.f32 %v760, %v767
  %769 = vst.msk [vmem:[%s4] sm:$0xff] %vm756, %v768
  // Predicated region
  $region14: #{tpu_custom_call.1} parent=0 // pred_check
    _
  $region15: #{tpu_custom_call.1} parent=0 // pred_check_branch
    %771 = sbr.rel (0) target = $region17
  $region16: #{tpu_custom_call.1} parent=0 // pred_region
    _
  $region17: #{tpu_custom_call.1} parent=0 // pred_fallthru
    _
  // Predicated region
  $region18: #{tpu_custom_call.1} parent=0 // pred_check
    _
  $region19: #{tpu_custom_call.1} parent=0 // pred_check_branch
    %773 = sbr.rel (0) target = $region21
  $region20: #{tpu_custom_call.1} parent=0 // pred_region
    _
  $region21: #{tpu_custom_call.1} parent=0 // pred_fallthru
    _

</llo_original>
